<compile_context>
chip_gen: v7x
topology: tpu7x:2x2x1
jax: 0.10.0
libtpu: 0.0.40
codegen_flags: <defaults>
</compile_context>

<pallas_src>
import functools

import numpy as np

import jax
import jax.numpy as jnp
from jax.experimental import pallas as pl
from jax.experimental.pallas import tpu as pltpu

_LANES = 128      # lane-dense width for the packed weight slab, biases and the output
_MASK_ROW0 = 8    # row offset of the mask block inside the aux slab (f32 8-row aligned)


# ----------------------------------------------------------------------------
# Offline repacking: express every layer on the OS=4 space-to-depth grid.
#
# Tensor representations on the base grid (cells u in [0,H/4), v in [0,W/4)):
#   full-res   (N,H,W,C)       -> (M, 16*C): col = (p*4+q)*C + c,  pixel (4u+p, 4v+q)
#   half-res   (N,H/2,W/2,C)   -> (M,  4*C): col = (a*2+b)*C + c,  pixel (2u+a, 2v+b)
#   quarter-res(N,H/4,W/4,C)   -> (M,    C)
# with M = N*(H/4)*(W/4) and row m = n*(gh*gw) + u*gw + v.
# A 3x3 conv tap becomes a base-grid row shift by d = eh*gw + ew (plus a validity mask
# emulating zero padding) followed by a dense channel mixing -- so each layer is one
# wide-K matmul over the shifted/stacked activations.
# ----------------------------------------------------------------------------
def _build_conv_eff(w, go, gi, mode):
    """Repack a 3x3 conv weight (KH,KW,Cin,Cout) into per-shift effective weights.

    go: output sub-pixel groups per axis; gi: input sub-pixel groups per axis.
    mode 'down': stride-2 conv (pad 1);  mode 'up': 2x nearest upsample then stride-1
    conv (pad 1).  Returns (shift_ids, w_eff (n_taps, gi*gi*Cin, go*go*Cout)); tap t uses
    base-grid shift id shift_ids[t] = (eh+1)*3 + (ew+1).
    """
    w = np.asarray(w, np.float32)
    kh, kw, cin, cout = w.shape
    blocks = {}
    for ah in range(go):
        for aw in range(go):
            for dy in range(kh):
                for dx in range(kw):
                    if mode == "down":
                        oh, ow = 2 * ah + dy - 1, 2 * aw + dx - 1
                    else:  # "up"
                        oh, ow = (ah + dy - 1) // 2, (aw + dx - 1) // 2
                    eh, ph = oh // gi, oh % gi
                    ew, pw = ow // gi, ow % gi
                    blk = blocks.setdefault(
                        (eh, ew), np.zeros((gi * gi * cin, go * go * cout), np.float32))
                    r0 = (ph * gi + pw) * cin
                    c0 = (ah * go + aw) * cout
                    blk[r0:r0 + cin, c0:c0 + cout] += w[dy, dx]
    keys = sorted(blocks.keys())
    shift_ids = tuple(int((eh + 1) * 3 + (ew + 1)) for eh, ew in keys)
    w_eff = np.stack([blocks[k] for k in keys], axis=0)
    return shift_ids, w_eff


def _build_head_eff(w, b, groups):
    """1x1 conv applied per sub-pixel group -> block-diagonal weight matrix."""
    w = np.asarray(w, np.float32)        # (1,1,Cin,Cout)
    cin, cout = w.shape[2], w.shape[3]
    we = np.zeros((groups * cin, groups * cout), np.float32)
    for g in range(groups):
        we[g * cin:(g + 1) * cin, g * cout:(g + 1) * cout] = w[0, 0]
    be = np.tile(np.asarray(b, np.float32), groups)
    return we, be


def _build_masks(n, gh, gw):
    """(M, 9) 0/1 validity masks: column e=(eh+1)*3+(ew+1) is 1 where the base-grid cell
    (u+eh, v+ew) is inside the image (emulates zero padding for shifted taps)."""
    m = n * gh * gw
    idx = np.arange(m)
    u = (idx // gw) % gh
    v = idx % gw
    mask = np.zeros((m, 9), np.float32)
    for eh in (-1, 0, 1):
        for ew in (-1, 0, 1):
            e = (eh + 1) * 3 + (ew + 1)
            ok = (u + eh >= 0) & (u + eh < gh) & (v + ew >= 0) & (v + ew < gw)
            mask[:, e] = ok.astype(np.float32)
    return mask


def prepare_params(params, n, h, w):
    """One-time offline repack of the PyTorch-layout weights into two packed slabs:
       * w slab  (K_total, 128) bf16 : all conv layers + head, taps stacked along K,
                                       output lanes zero-padded to 128 (lane-dense).
       * aux slab(8+M, 128)    f32  : rows 0..4 = per-layer biases, rows 8.. = masks.
    """
    assert h % 4 == 0 and w % 4 == 0, "H, W must be multiples of the output stride (4)"
    gh, gw = h // 4, w // 4
    m = n * gh * gw

    conv_defs = [
        ("bb1", 2, 4, "down", 4),     # (name, go, gi, mode, bias sub-pixel tiling)
        ("bb2", 1, 2, "down", 1),
        ("dc1", 2, 1, "up", 4),
        ("dc2", 4, 2, "up", 16),
    ]
    w_blocks, bias_rows, layer_meta = [], [], []
    row_off = 0
    for name, go, gi, mode, btile in conv_defs:
        ids, w_eff = _build_conv_eff(params[name + "_w"], go=go, gi=gi, mode=mode)
        n_taps, k_tap, n_out = w_eff.shape
        k_tot = n_taps * k_tap
        assert k_tot % 16 == 0 and n_out <= _LANES   # bf16 sublane-aligned row blocks
        blk = np.zeros((k_tot, _LANES), np.float32)
        blk[:, :n_out] = w_eff.reshape(k_tot, n_out)
        w_blocks.append(blk)
        bias_rows.append(np.tile(np.asarray(params[name + "_b"], np.float32), btile))
        layer_meta.append(dict(row_off=row_off, k_tot=k_tot, n_out=n_out,
                               taps=ids, bias_row=len(bias_rows) - 1))
        row_off += k_tot

    w5e, b5e = _build_head_eff(params["hd_w"], params["hd_b"], groups=16)
    k_h, n_h = w5e.shape
    assert k_h % 16 == 0 and n_h <= _LANES
    blk = np.zeros((k_h, _LANES), np.float32)
    blk[:, :n_h] = w5e
    w_blocks.append(blk)
    bias_rows.append(b5e)
    head_meta = dict(row_off=row_off, k_tot=k_h, n_out=n_h, bias_row=len(bias_rows) - 1)
    row_off += k_h

    w_slab = np.concatenate(w_blocks, axis=0)                  # (K_total, 128)
    aux = np.zeros((_MASK_ROW0 + m, _LANES), np.float32)
    for i, b in enumerate(bias_rows):
        aux[i, :b.shape[0]] = b
    aux[_MASK_ROW0:, :9] = _build_masks(n, gh, gw)

    prep = {"w": jnp.asarray(w_slab, jnp.bfloat16),
            "aux": jnp.asarray(aux, jnp.float32)}
    meta = dict(n=n, gh=gh, gw=gw,
                layers=tuple(layer_meta), head=head_meta,
                n_class=int(np.asarray(params["hd_b"]).shape[0]))
    return prep, meta


# ----------------------------------------------------------------------------
# Pallas kernel: the whole forward pass, VMEM-resident.
# One wide-K bf16 matmul per layer (f32 accumulate); taps realised as row shifts + masks.
# ----------------------------------------------------------------------------
def _fused_kernel(x_ref, w_ref, aux_ref, o_ref, *, meta):
    f32, bf16 = jnp.float32, jnp.bfloat16
    gw = meta["gw"]
    m = meta["n"] * meta["gh"] * gw

    # (M, 128) block of precomputed 0/1 validity masks (one lane per shift id).
    mask_blk = aux_ref[_MASK_ROW0:_MASK_ROW0 + m, :]

    def shift_rows(a, d):
        """out[r] = a[r + d] for in-range rows; rows shifted in from outside are zero
        (and are masked again anyway).  Pure sublane data movement -- no MXU work."""
        if d == 0:
            return a
        pad = jnp.zeros((abs(d), a.shape[1]), a.dtype)
        if d > 0:
            return jnp.concatenate([a[d:, :], pad], axis=0)
        return jnp.concatenate([pad, a[:a.shape[0] + d, :]], axis=0)

    def conv(a, spec, skip=None):
        # Stack every tap along K -> ONE wide-K matmul for the whole layer.
        parts = []
        for e in spec["taps"]:
            eh, ew = e // 3 - 1, e % 3 - 1
            d = eh * gw + ew
            if d == 0:                      # centre tap: identity shift, always valid
                parts.append(a.astype(bf16))
            else:
                shifted = shift_rows(a, d) * mask_blk[:, e:e + 1]      # f32 mask mult
                parts.append(shifted.astype(bf16))
        g = parts[0] if len(parts) == 1 else jnp.concatenate(parts, axis=1)
        wm = w_ref[spec["row_off"]:spec["row_off"] + spec["k_tot"], :]  # (K, 128) bf16
        acc = jnp.dot(g, wm, preferred_element_type=f32)                # (M, 128) f32
        acc = acc + aux_ref[spec["bias_row"]:spec["bias_row"] + 1, :]   # f32 bias
        acc = jnp.maximum(acc, 0.0)                                     # ReLU (f32)
        acc = acc[:, :spec["n_out"]]
        if skip is not None:                                            # f32 skip add
            acc = acc + skip
        return acc

    lyr = meta["layers"]
    x = x_ref[...].astype(f32)                 # (M, 16*Cin); bf16 payload from HBM
    y1 = conv(x, lyr[0])                       # backbone stage 1 (stride-2 conv)
    f2 = conv(y1, lyr[1])                      # backbone stage 2 (stride-2 conv)
    d1 = conv(f2, lyr[2], skip=y1)             # decoder: up2x + conv + skip
    d2 = conv(d1, lyr[3], skip=x)              # decoder: up2x + conv + skip

    # head: dropout (identity in eval) + 1x1 conv per sub-pixel group, no activation.
    hd = meta["head"]
    wh = w_ref[hd["row_off"]:hd["row_off"] + hd["k_tot"], :]
    logits = jnp.dot(d2.astype(bf16), wh, preferred_element_type=f32)
    logits = logits + aux_ref[hd["bias_row"]:hd["bias_row"] + 1, :]
    o_ref[...] = logits                         # single lane-dense (M, 128) f32 store


def segmentator_forward(prep, x_nchw, *, meta):
    n, gh, gw = meta["n"], meta["gh"], meta["gw"]
    m = n * gh * gw
    n_class = meta["n_class"]
    cin = x_nchw.shape[1]

    # NCHW -> OS=4 space-to-depth matrix (M, 16*Cin); bf16 halves the single input DMA.
    # TODO(synk): at real resolutions fold this repack into the kernel instead of a
    #             separate XLA transpose.
    x = jnp.transpose(x_nchw, (0, 2, 3, 1))
    x = x.reshape(n, gh, 4, gw, 4, cin).transpose(0, 1, 3, 2, 4, 5)
    x = x.reshape(m, 16 * cin).astype(jnp.bfloat16)

    inputs = (x, prep["w"], prep["aux"])

    def full2d(shape):
        return pl.BlockSpec(shape, lambda i: (0, 0))

    out = pl.pallas_call(
        functools.partial(_fused_kernel, meta=meta),
        out_shape=jax.ShapeDtypeStruct((m, _LANES), jnp.float32),
        grid=(1,),                                   # all work fits one TC at this size
        in_specs=[full2d(a.shape) for a in inputs],
        out_specs=full2d((m, _LANES)),
        compiler_params=pltpu.CompilerParams(
            dimension_semantics=("arbitrary",)),
    )(*inputs)

    # strip head lane padding, un-space-to-depth -> NHWC -> PyTorch NCHW
    logits_s2d = out[:, :16 * n_class]
    y = logits_s2d.reshape(n, gh, gw, 4, 4, n_class).transpose(0, 1, 3, 2, 4, 5)
    y = y.reshape(n, 4 * gh, 4 * gw, n_class)
    return jnp.transpose(y, (0, 3, 1, 2))


# ----------------------------------------------------------------------------
# Parameters (same representative architecture as before) + pure-JAX reference
# ----------------------------------------------------------------------------
def init_params(key, in_ch=4, n_class=6):
    ks = jax.random.split(key, 10)
    p = {}

    def w(k, shape):
        return jax.random.normal(k, shape, jnp.float32) * 0.1

    p["bb1_w"], p["bb1_b"] = w(ks[0], (3, 3, in_ch, 8)), w(ks[1], (8,))
    p["bb2_w"], p["bb2_b"] = w(ks[2], (3, 3, 8, 16)),    w(ks[3], (16,))
    p["dc1_w"], p["dc1_b"] = w(ks[4], (3, 3, 16, 8)),    w(ks[5], (8,))
    p["dc2_w"], p["dc2_b"] = w(ks[6], (3, 3, 8, in_ch)), w(ks[7], (in_ch,))
    p["hd_w"],  p["hd_b"]  = w(ks[8], (1, 1, in_ch, n_class)), w(ks[9], (n_class,))
    return p


def _conv_ref(x, w, b, stride=1, relu=True, skip=None):
    ph, pw = w.shape[0] // 2, w.shape[1] // 2
    y = jax.lax.conv_general_dilated(
        x.astype(jnp.bfloat16), jnp.asarray(w, jnp.bfloat16),
        window_strides=(stride, stride), padding=((ph, ph), (pw, pw)),
        dimension_numbers=("NHWC", "HWIO", "NHWC"),
        preferred_element_type=jnp.float32)
    y = y + jnp.asarray(b, jnp.float32)
    if relu:
        y = jnp.maximum(y, 0.0)
    if skip is not None:
        y = y + skip
    return y


def reference_forward(params, x_nchw):
    x = jnp.transpose(x_nchw, (0, 2, 3, 1)).astype(jnp.float32)
    f1 = _conv_ref(x, params["bb1_w"], params["bb1_b"], stride=2)
    f2 = _conv_ref(f1, params["bb2_w"], params["bb2_b"], stride=2)
    u1 = jnp.repeat(jnp.repeat(f2, 2, axis=1), 2, axis=2)
    d1 = _conv_ref(u1, params["dc1_w"], params["dc1_b"], stride=1, skip=f1)
    u2 = jnp.repeat(jnp.repeat(d1, 2, axis=1), 2, axis=2)
    d2 = _conv_ref(u2, params["dc2_w"], params["dc2_b"], stride=1, skip=x)
    logits = _conv_ref(d2, params["hd_w"], params["hd_b"], stride=1, relu=False)
    return jnp.transpose(logits, (0, 3, 1, 2))


if __name__ == "__main__":
    key = jax.random.PRNGKey(0)
    k_in, k_par = jax.random.split(key)

    N, C_IN, H, W, N_CLASS = 2, 4, 16, 16, 6
    # bf16-representable test input: the kernel ships x to HBM as bf16 (half the input
    # payload), so a bf16-exact input keeps the kernel/reference comparison clean on the
    # full-resolution skip path as well.
    x = jax.random.normal(k_in, (N, C_IN, H, W), jnp.float32)
    x = x.astype(jnp.bfloat16).astype(jnp.float32)
    params = init_params(k_par, in_ch=C_IN, n_class=N_CLASS)

    prep, meta = prepare_params(params, N, H, W)
    fwd = jax.jit(functools.partial(segmentator_forward, meta=meta))
    out = jax.block_until_ready(fwd(prep, x))

    assert out.shape == (N, N_CLASS, H, W), out.shape
    assert out.dtype == jnp.float32
    assert bool(jnp.all(jnp.isfinite(out)))

    # correctness vs a pure-JAX reference of the same network (bf16 matmul operands,
    # f32 accumulation in both paths -> only rounding-order level differences expected)
    ref = jax.block_until_ready(jax.jit(reference_forward)(params, x))
    max_err = float(jnp.max(jnp.abs(out - ref)))
    assert max_err < 3e-2, f"kernel/reference mismatch: max abs err = {max_err}"

    print("KERNEL_OK")
</pallas_src>

<mosaic_0001>
module attributes {stable_mosaic.version = 11 : i64} {
  func.func @_fused_kernel(%arg0: i32, %arg1: memref<32x64xbf16, #tpu.memory_space<vmem>>, %arg2: memref<880x128xbf16, #tpu.memory_space<vmem>>, %arg3: memref<40x128xf32, #tpu.memory_space<vmem>>, %arg4: memref<32x128xf32, #tpu.memory_space<vmem>>) attributes {dimension_semantics = [#tpu.dimension_semantics<arbitrary>], iteration_bounds = array<i64: 1>, scalar_prefetch = 0 : i64, scratch_operands = 0 : i64, tpu.core_type = #tpu.core_type<tc>, window_params = [{pipeline_mode = #tpu.pipeline_mode<synchronous>, transform_indices = @transform_0, window_bounds = array<i64: 32, 64>}, {pipeline_mode = #tpu.pipeline_mode<synchronous>, transform_indices = @transform_1, window_bounds = array<i64: 880, 128>}, {pipeline_mode = #tpu.pipeline_mode<synchronous>, transform_indices = @transform_2, window_bounds = array<i64: 40, 128>}, {pipeline_mode = #tpu.pipeline_mode<synchronous>, transform_indices = @transform_3, window_bounds = array<i64: 32, 128>}]} {
    %c8 = arith.constant 8 : index
    %c0 = arith.constant 0 : index
    %0 = vector.load %arg3[%c8, %c0] : memref<40x128xf32, #tpu.memory_space<vmem>>, vector<32x128xf32>
    %c0_0 = arith.constant 0 : index
    %c0_1 = arith.constant 0 : index
    %1 = vector.load %arg1[%c0_0, %c0_1] : memref<32x64xbf16, #tpu.memory_space<vmem>>, vector<32x64xbf16>
    %2 = arith.extf %1 : vector<32x64xbf16> to vector<32x64xf32>
    %cst = arith.constant 0.000000e+00 : f32
    %3 = vector.broadcast %cst : f32 to vector<5x64xf32>
    %4 = vector.extract_strided_slice %2 {offsets = [0, 0], sizes = [27, 64], strides = [1, 1]} : vector<32x64xf32> to vector<27x64xf32>
    %5 = tpu.concatenate %3, %4 in 0 : vector<5x64xf32>, vector<27x64xf32> -> vector<32x64xf32>
    %6 = vector.extract_strided_slice %0 {offsets = [0, 0], sizes = [32, 1], strides = [1, 1]} : vector<32x128xf32> to vector<32x1xf32>
    %7 = vector.broadcast %6 : vector<32x1xf32> to vector<32x64xf32>
    %8 = arith.mulf %5, %7 : vector<32x64xf32>
    %9 = arith.truncf %8 : vector<32x64xf32> to vector<32x64xbf16>
    %cst_2 = arith.constant 0.000000e+00 : f32
    %10 = vector.broadcast %cst_2 : f32 to vector<4x64xf32>
    %11 = vector.extract_strided_slice %2 {offsets = [0, 0], sizes = [28, 64], strides = [1, 1]} : vector<32x64xf32> to vector<28x64xf32>
    %12 = tpu.concatenate %10, %11 in 0 : vector<4x64xf32>, vector<28x64xf32> -> vector<32x64xf32>
    %13 = vector.extract_strided_slice %0 {offsets = [0, 1], sizes = [32, 1], strides = [1, 1]} : vector<32x128xf32> to vector<32x1xf32>
    %14 = vector.broadcast %13 : vector<32x1xf32> to vector<32x64xf32>
    %15 = arith.mulf %12, %14 : vector<32x64xf32>
    %16 = arith.truncf %15 : vector<32x64xf32> to vector<32x64xbf16>
    %cst_3 = arith.constant 0.000000e+00 : f32
    %17 = vector.broadcast %cst_3 : f32 to vector<1x64xf32>
    %18 = vector.extract_strided_slice %2 {offsets = [0, 0], sizes = [31, 64], strides = [1, 1]} : vector<32x64xf32> to vector<31x64xf32>
    %19 = tpu.concatenate %17, %18 in 0 : vector<1x64xf32>, vector<31x64xf32> -> vector<32x64xf32>
    %20 = vector.extract_strided_slice %0 {offsets = [0, 3], sizes = [32, 1], strides = [1, 1]} : vector<32x128xf32> to vector<32x1xf32>
    %21 = vector.broadcast %20 : vector<32x1xf32> to vector<32x64xf32>
    %22 = arith.mulf %19, %21 : vector<32x64xf32>
    %23 = arith.truncf %22 : vector<32x64xf32> to vector<32x64xbf16>
    %24 = arith.truncf %2 : vector<32x64xf32> to vector<32x64xbf16>
    %25 = tpu.concatenate %9, %16, %23, %24 in 1 : vector<32x64xbf16>, vector<32x64xbf16>, vector<32x64xbf16>, vector<32x64xbf16> -> vector<32x256xbf16>
    %c0_4 = arith.constant 0 : index
    %c0_5 = arith.constant 0 : index
    %26 = vector.load %arg2[%c0_4, %c0_5] : memref<880x128xbf16, #tpu.memory_space<vmem>>, vector<256x128xbf16>
    %cst_6 = arith.constant dense<0.000000e+00> : vector<32x128xf32>
    %27 = tpu.matmul %25, %26, %cst_6 {dimension_numbers = #tpu.dot_dimension_numbers<[1], [0], [0], [1], [0, 0, 1, 1], [], []>} : vector<32x256xbf16>, vector<256x128xbf16>, vector<32x128xf32> -> vector<32x128xf32>
    %c0_7 = arith.constant 0 : index
    %c0_8 = arith.constant 0 : index
    %28 = vector.load %arg3[%c0_7, %c0_8] : memref<40x128xf32, #tpu.memory_space<vmem>>, vector<1x128xf32>
    %29 = vector.broadcast %28 : vector<1x128xf32> to vector<32x128xf32>
    %30 = arith.addf %27, %29 : vector<32x128xf32>
    %cst_9 = arith.constant 0.000000e+00 : f32
    %31 = vector.broadcast %cst_9 : f32 to vector<32x128xf32>
    %32 = arith.maximumf %30, %31 : vector<32x128xf32>
    %33 = vector.extract_strided_slice %32 {offsets = [0, 0], sizes = [32, 32], strides = [1, 1]} : vector<32x128xf32> to vector<32x32xf32>
    %cst_10 = arith.constant 0.000000e+00 : f32
    %34 = vector.broadcast %cst_10 : f32 to vector<5x32xf32>
    %35 = vector.extract_strided_slice %33 {offsets = [0, 0], sizes = [27, 32], strides = [1, 1]} : vector<32x32xf32> to vector<27x32xf32>
    %36 = tpu.concatenate %34, %35 in 0 : vector<5x32xf32>, vector<27x32xf32> -> vector<32x32xf32>
    %37 = vector.extract_strided_slice %0 {offsets = [0, 0], sizes = [32, 1], strides = [1, 1]} : vector<32x128xf32> to vector<32x1xf32>
    %38 = vector.broadcast %37 : vector<32x1xf32> to vector<32x32xf32>
    %39 = arith.mulf %36, %38 : vector<32x32xf32>
    %40 = arith.truncf %39 : vector<32x32xf32> to vector<32x32xbf16>
    %cst_11 = arith.constant 0.000000e+00 : f32
    %41 = vector.broadcast %cst_11 : f32 to vector<4x32xf32>
    %42 = vector.extract_strided_slice %33 {offsets = [0, 0], sizes = [28, 32], strides = [1, 1]} : vector<32x32xf32> to vector<28x32xf32>
    %43 = tpu.concatenate %41, %42 in 0 : vector<4x32xf32>, vector<28x32xf32> -> vector<32x32xf32>
    %44 = vector.extract_strided_slice %0 {offsets = [0, 1], sizes = [32, 1], strides = [1, 1]} : vector<32x128xf32> to vector<32x1xf32>
    %45 = vector.broadcast %44 : vector<32x1xf32> to vector<32x32xf32>
    %46 = arith.mulf %43, %45 : vector<32x32xf32>
    %47 = arith.truncf %46 : vector<32x32xf32> to vector<32x32xbf16>
    %cst_12 = arith.constant 0.000000e+00 : f32
    %48 = vector.broadcast %cst_12 : f32 to vector<1x32xf32>
    %49 = vector.extract_strided_slice %33 {offsets = [0, 0], sizes = [31, 32], strides = [1, 1]} : vector<32x32xf32> to vector<31x32xf32>
    %50 = tpu.concatenate %48, %49 in 0 : vector<1x32xf32>, vector<31x32xf32> -> vector<32x32xf32>
    %51 = vector.extract_strided_slice %0 {offsets = [0, 3], sizes = [32, 1], strides = [1, 1]} : vector<32x128xf32> to vector<32x1xf32>
    %52 = vector.broadcast %51 : vector<32x1xf32> to vector<32x32xf32>
    %53 = arith.mulf %50, %52 : vector<32x32xf32>
    %54 = arith.truncf %53 : vector<32x32xf32> to vector<32x32xbf16>
    %55 = arith.truncf %33 : vector<32x32xf32> to vector<32x32xbf16>
    %56 = tpu.concatenate %40, %47, %54, %55 in 1 : vector<32x32xbf16>, vector<32x32xbf16>, vector<32x32xbf16>, vector<32x32xbf16> -> vector<32x128xbf16>
    %c256 = arith.constant 256 : index
    %c0_13 = arith.constant 0 : index
    %57 = vector.load %arg2[%c256, %c0_13] : memref<880x128xbf16, #tpu.memory_space<vmem>>, vector<128x128xbf16>
    %cst_14 = arith.constant dense<0.000000e+00> : vector<32x128xf32>
    %58 = tpu.matmul %56, %57, %cst_14 {dimension_numbers = #tpu.dot_dimension_numbers<[1], [0], [0], [1], [0, 0, 1, 1], [], []>} : vector<32x128xbf16>, vector<128x128xbf16>, vector<32x128xf32> -> vector<32x128xf32>
    %c1 = arith.constant 1 : index
    %c0_15 = arith.constant 0 : index
    %59 = vector.load %arg3[%c1, %c0_15] : memref<40x128xf32, #tpu.memory_space<vmem>>, vector<1x128xf32>
    %60 = vector.broadcast %59 : vector<1x128xf32> to vector<32x128xf32>
    %61 = arith.addf %58, %60 : vector<32x128xf32>
    %cst_16 = arith.constant 0.000000e+00 : f32
    %62 = vector.broadcast %cst_16 : f32 to vector<32x128xf32>
    %63 = arith.maximumf %61, %62 : vector<32x128xf32>
    %64 = vector.extract_strided_slice %63 {offsets = [0, 0], sizes = [32, 16], strides = [1, 1]} : vector<32x128xf32> to vector<32x16xf32>
    %cst_17 = arith.constant 0.000000e+00 : f32
    %65 = vector.broadcast %cst_17 : f32 to vector<5x16xf32>
    %66 = vector.extract_strided_slice %64 {offsets = [0, 0], sizes = [27, 16], strides = [1, 1]} : vector<32x16xf32> to vector<27x16xf32>
    %67 = tpu.concatenate %65, %66 in 0 : vector<5x16xf32>, vector<27x16xf32> -> vector<32x16xf32>
    %68 = vector.extract_strided_slice %0 {offsets = [0, 0], sizes = [32, 1], strides = [1, 1]} : vector<32x128xf32> to vector<32x1xf32>
    %69 = vector.broadcast %68 : vector<32x1xf32> to vector<32x16xf32>
    %70 = arith.mulf %67, %69 : vector<32x16xf32>
    %71 = arith.truncf %70 : vector<32x16xf32> to vector<32x16xbf16>
    %cst_18 = arith.constant 0.000000e+00 : f32
    %72 = vector.broadcast %cst_18 : f32 to vector<4x16xf32>
    %73 = vector.extract_strided_slice %64 {offsets = [0, 0], sizes = [28, 16], strides = [1, 1]} : vector<32x16xf32> to vector<28x16xf32>
    %74 = tpu.concatenate %72, %73 in 0 : vector<4x16xf32>, vector<28x16xf32> -> vector<32x16xf32>
    %75 = vector.extract_strided_slice %0 {offsets = [0, 1], sizes = [32, 1], strides = [1, 1]} : vector<32x128xf32> to vector<32x1xf32>
    %76 = vector.broadcast %75 : vector<32x1xf32> to vector<32x16xf32>
    %77 = arith.mulf %74, %76 : vector<32x16xf32>
    %78 = arith.truncf %77 : vector<32x16xf32> to vector<32x16xbf16>
    %cst_19 = arith.constant 0.000000e+00 : f32
    %79 = vector.broadcast %cst_19 : f32 to vector<3x16xf32>
    %80 = vector.extract_strided_slice %64 {offsets = [0, 0], sizes = [29, 16], strides = [1, 1]} : vector<32x16xf32> to vector<29x16xf32>
    %81 = tpu.concatenate %79, %80 in 0 : vector<3x16xf32>, vector<29x16xf32> -> vector<32x16xf32>
    %82 = vector.extract_strided_slice %0 {offsets = [0, 2], sizes = [32, 1], strides = [1, 1]} : vector<32x128xf32> to vector<32x1xf32>
    %83 = vector.broadcast %82 : vector<32x1xf32> to vector<32x16xf32>
    %84 = arith.mulf %81, %83 : vector<32x16xf32>
    %85 = arith.truncf %84 : vector<32x16xf32> to vector<32x16xbf16>
    %cst_20 = arith.constant 0.000000e+00 : f32
    %86 = vector.broadcast %cst_20 : f32 to vector<1x16xf32>
    %87 = vector.extract_strided_slice %64 {offsets = [0, 0], sizes = [31, 16], strides = [1, 1]} : vector<32x16xf32> to vector<31x16xf32>
    %88 = tpu.concatenate %86, %87 in 0 : vector<1x16xf32>, vector<31x16xf32> -> vector<32x16xf32>
    %89 = vector.extract_strided_slice %0 {offsets = [0, 3], sizes = [32, 1], strides = [1, 1]} : vector<32x128xf32> to vector<32x1xf32>
    %90 = vector.broadcast %89 : vector<32x1xf32> to vector<32x16xf32>
    %91 = arith.mulf %88, %90 : vector<32x16xf32>
    %92 = arith.truncf %91 : vector<32x16xf32> to vector<32x16xbf16>
    %93 = arith.truncf %64 : vector<32x16xf32> to vector<32x16xbf16>
    %cst_21 = arith.constant 0.000000e+00 : f32
    %94 = vector.broadcast %cst_21 : f32 to vector<1x16xf32>
    %95 = vector.extract_strided_slice %64 {offsets = [1, 0], sizes = [31, 16], strides = [1, 1]} : vector<32x16xf32> to vector<31x16xf32>
    %96 = tpu.concatenate %95, %94 in 0 : vector<31x16xf32>, vector<1x16xf32> -> vector<32x16xf32>
    %97 = vector.extract_strided_slice %0 {offsets = [0, 5], sizes = [32, 1], strides = [1, 1]} : vector<32x128xf32> to vector<32x1xf32>
    %98 = vector.broadcast %97 : vector<32x1xf32> to vector<32x16xf32>
    %99 = arith.mulf %96, %98 : vector<32x16xf32>
    %100 = arith.truncf %99 : vector<32x16xf32> to vector<32x16xbf16>
    %cst_22 = arith.constant 0.000000e+00 : f32
    %101 = vector.broadcast %cst_22 : f32 to vector<3x16xf32>
    %102 = vector.extract_strided_slice %64 {offsets = [3, 0], sizes = [29, 16], strides = [1, 1]} : vector<32x16xf32> to vector<29x16xf32>
    %103 = tpu.concatenate %102, %101 in 0 : vector<29x16xf32>, vector<3x16xf32> -> vector<32x16xf32>
    %104 = vector.extract_strided_slice %0 {offsets = [0, 6], sizes = [32, 1], strides = [1, 1]} : vector<32x128xf32> to vector<32x1xf32>
    %105 = vector.broadcast %104 : vector<32x1xf32> to vector<32x16xf32>
    %106 = arith.mulf %103, %105 : vector<32x16xf32>
    %107 = arith.truncf %106 : vector<32x16xf32> to vector<32x16xbf16>
    %cst_23 = arith.constant 0.000000e+00 : f32
    %108 = vector.broadcast %cst_23 : f32 to vector<4x16xf32>
    %109 = vector.extract_strided_slice %64 {offsets = [4, 0], sizes = [28, 16], strides = [1, 1]} : vector<32x16xf32> to vector<28x16xf32>
    %110 = tpu.concatenate %109, %108 in 0 : vector<28x16xf32>, vector<4x16xf32> -> vector<32x16xf32>
    %111 = vector.extract_strided_slice %0 {offsets = [0, 7], sizes = [32, 1], strides = [1, 1]} : vector<32x128xf32> to vector<32x1xf32>
    %112 = vector.broadcast %111 : vector<32x1xf32> to vector<32x16xf32>
    %113 = arith.mulf %110, %112 : vector<32x16xf32>
    %114 = arith.truncf %113 : vector<32x16xf32> to vector<32x16xbf16>
    %cst_24 = arith.constant 0.000000e+00 : f32
    %115 = vector.broadcast %cst_24 : f32 to vector<5x16xf32>
    %116 = vector.extract_strided_slice %64 {offsets = [5, 0], sizes = [27, 16], strides = [1, 1]} : vector<32x16xf32> to vector<27x16xf32>
    %117 = tpu.concatenate %116, %115 in 0 : vector<27x16xf32>, vector<5x16xf32> -> vector<32x16xf32>
    %118 = vector.extract_strided_slice %0 {offsets = [0, 8], sizes = [32, 1], strides = [1, 1]} : vector<32x128xf32> to vector<32x1xf32>
    %119 = vector.broadcast %118 : vector<32x1xf32> to vector<32x16xf32>
    %120 = arith.mulf %117, %119 : vector<32x16xf32>
    %121 = arith.truncf %120 : vector<32x16xf32> to vector<32x16xbf16>
    %122 = tpu.concatenate %71, %78, %85, %92, %93, %100, %107, %114, %121 in 1 : vector<32x16xbf16>, vector<32x16xbf16>, vector<32x16xbf16>, vector<32x16xbf16>, vector<32x16xbf16>, vector<32x16xbf16>, vector<32x16xbf16>, vector<32x16xbf16>, vector<32x16xbf16> -> vector<32x144xbf16>
    %c384 = arith.constant 384 : index
    %c0_25 = arith.constant 0 : index
    %123 = vector.load %arg2[%c384, %c0_25] : memref<880x128xbf16, #tpu.memory_space<vmem>>, vector<144x128xbf16>
    %cst_26 = arith.constant dense<0.000000e+00> : vector<32x128xf32>
    %124 = tpu.matmul %122, %123, %cst_26 {dimension_numbers = #tpu.dot_dimension_numbers<[1], [0], [0], [1], [0, 0, 1, 1], [], []>} : vector<32x144xbf16>, vector<144x128xbf16>, vector<32x128xf32> -> vector<32x128xf32>
    %c2 = arith.constant 2 : index
    %c0_27 = arith.constant 0 : index
    %125 = vector.load %arg3[%c2, %c0_27] : memref<40x128xf32, #tpu.memory_space<vmem>>, vector<1x128xf32>
    %126 = vector.broadcast %125 : vector<1x128xf32> to vector<32x128xf32>
    %127 = arith.addf %124, %126 : vector<32x128xf32>
    %cst_28 = arith.constant 0.000000e+00 : f32
    %128 = vector.broadcast %cst_28 : f32 to vector<32x128xf32>
    %129 = arith.maximumf %127, %128 : vector<32x128xf32>
    %130 = vector.extract_strided_slice %129 {offsets = [0, 0], sizes = [32, 32], strides = [1, 1]} : vector<32x128xf32> to vector<32x32xf32>
    %131 = arith.addf %130, %33 : vector<32x32xf32>
    %cst_29 = arith.constant 0.000000e+00 : f32
    %132 = vector.broadcast %cst_29 : f32 to vector<5x32xf32>
    %133 = vector.extract_strided_slice %131 {offsets = [0, 0], sizes = [27, 32], strides = [1, 1]} : vector<32x32xf32> to vector<27x32xf32>
    %134 = tpu.concatenate %132, %133 in 0 : vector<5x32xf32>, vector<27x32xf32> -> vector<32x32xf32>
    %135 = vector.extract_strided_slice %0 {offsets = [0, 0], sizes = [32, 1], strides = [1, 1]} : vector<32x128xf32> to vector<32x1xf32>
    %136 = vector.broadcast %135 : vector<32x1xf32> to vector<32x32xf32>
    %137 = arith.mulf %134, %136 : vector<32x32xf32>
    %138 = arith.truncf %137 : vector<32x32xf32> to vector<32x32xbf16>
    %cst_30 = arith.constant 0.000000e+00 : f32
    %139 = vector.broadcast %cst_30 : f32 to vector<4x32xf32>
    %140 = vector.extract_strided_slice %131 {offsets = [0, 0], sizes = [28, 32], strides = [1, 1]} : vector<32x32xf32> to vector<28x32xf32>
    %141 = tpu.concatenate %139, %140 in 0 : vector<4x32xf32>, vector<28x32xf32> -> vector<32x32xf32>
    %142 = vector.extract_strided_slice %0 {offsets = [0, 1], sizes = [32, 1], strides = [1, 1]} : vector<32x128xf32> to vector<32x1xf32>
    %143 = vector.broadcast %142 : vector<32x1xf32> to vector<32x32xf32>
    %144 = arith.mulf %141, %143 : vector<32x32xf32>
    %145 = arith.truncf %144 : vector<32x32xf32> to vector<32x32xbf16>
    %cst_31 = arith.constant 0.000000e+00 : f32
    %146 = vector.broadcast %cst_31 : f32 to vector<3x32xf32>
    %147 = vector.extract_strided_slice %131 {offsets = [0, 0], sizes = [29, 32], strides = [1, 1]} : vector<32x32xf32> to vector<29x32xf32>
    %148 = tpu.concatenate %146, %147 in 0 : vector<3x32xf32>, vector<29x32xf32> -> vector<32x32xf32>
    %149 = vector.extract_strided_slice %0 {offsets = [0, 2], sizes = [32, 1], strides = [1, 1]} : vector<32x128xf32> to vector<32x1xf32>
    %150 = vector.broadcast %149 : vector<32x1xf32> to vector<32x32xf32>
    %151 = arith.mulf %148, %150 : vector<32x32xf32>
    %152 = arith.truncf %151 : vector<32x32xf32> to vector<32x32xbf16>
    %cst_32 = arith.constant 0.000000e+00 : f32
    %153 = vector.broadcast %cst_32 : f32 to vector<1x32xf32>
    %154 = vector.extract_strided_slice %131 {offsets = [0, 0], sizes = [31, 32], strides = [1, 1]} : vector<32x32xf32> to vector<31x32xf32>
    %155 = tpu.concatenate %153, %154 in 0 : vector<1x32xf32>, vector<31x32xf32> -> vector<32x32xf32>
    %156 = vector.extract_strided_slice %0 {offsets = [0, 3], sizes = [32, 1], strides = [1, 1]} : vector<32x128xf32> to vector<32x1xf32>
    %157 = vector.broadcast %156 : vector<32x1xf32> to vector<32x32xf32>
    %158 = arith.mulf %155, %157 : vector<32x32xf32>
    %159 = arith.truncf %158 : vector<32x32xf32> to vector<32x32xbf16>
    %160 = arith.truncf %131 : vector<32x32xf32> to vector<32x32xbf16>
    %cst_33 = arith.constant 0.000000e+00 : f32
    %161 = vector.broadcast %cst_33 : f32 to vector<1x32xf32>
    %162 = vector.extract_strided_slice %131 {offsets = [1, 0], sizes = [31, 32], strides = [1, 1]} : vector<32x32xf32> to vector<31x32xf32>
    %163 = tpu.concatenate %162, %161 in 0 : vector<31x32xf32>, vector<1x32xf32> -> vector<32x32xf32>
    %164 = vector.extract_strided_slice %0 {offsets = [0, 5], sizes = [32, 1], strides = [1, 1]} : vector<32x128xf32> to vector<32x1xf32>
    %165 = vector.broadcast %164 : vector<32x1xf32> to vector<32x32xf32>
    %166 = arith.mulf %163, %165 : vector<32x32xf32>
    %167 = arith.truncf %166 : vector<32x32xf32> to vector<32x32xbf16>
    %cst_34 = arith.constant 0.000000e+00 : f32
    %168 = vector.broadcast %cst_34 : f32 to vector<3x32xf32>
    %169 = vector.extract_strided_slice %131 {offsets = [3, 0], sizes = [29, 32], strides = [1, 1]} : vector<32x32xf32> to vector<29x32xf32>
    %170 = tpu.concatenate %169, %168 in 0 : vector<29x32xf32>, vector<3x32xf32> -> vector<32x32xf32>
    %171 = vector.extract_strided_slice %0 {offsets = [0, 6], sizes = [32, 1], strides = [1, 1]} : vector<32x128xf32> to vector<32x1xf32>
    %172 = vector.broadcast %171 : vector<32x1xf32> to vector<32x32xf32>
    %173 = arith.mulf %170, %172 : vector<32x32xf32>
    %174 = arith.truncf %173 : vector<32x32xf32> to vector<32x32xbf16>
    %cst_35 = arith.constant 0.000000e+00 : f32
    %175 = vector.broadcast %cst_35 : f32 to vector<4x32xf32>
    %176 = vector.extract_strided_slice %131 {offsets = [4, 0], sizes = [28, 32], strides = [1, 1]} : vector<32x32xf32> to vector<28x32xf32>
    %177 = tpu.concatenate %176, %175 in 0 : vector<28x32xf32>, vector<4x32xf32> -> vector<32x32xf32>
    %178 = vector.extract_strided_slice %0 {offsets = [0, 7], sizes = [32, 1], strides = [1, 1]} : vector<32x128xf32> to vector<32x1xf32>
    %179 = vector.broadcast %178 : vector<32x1xf32> to vector<32x32xf32>
    %180 = arith.mulf %177, %179 : vector<32x32xf32>
    %181 = arith.truncf %180 : vector<32x32xf32> to vector<32x32xbf16>
    %cst_36 = arith.constant 0.000000e+00 : f32
    %182 = vector.broadcast %cst_36 : f32 to vector<5x32xf32>
    %183 = vector.extract_strided_slice %131 {offsets = [5, 0], sizes = [27, 32], strides = [1, 1]} : vector<32x32xf32> to vector<27x32xf32>
    %184 = tpu.concatenate %183, %182 in 0 : vector<27x32xf32>, vector<5x32xf32> -> vector<32x32xf32>
    %185 = vector.extract_strided_slice %0 {offsets = [0, 8], sizes = [32, 1], strides = [1, 1]} : vector<32x128xf32> to vector<32x1xf32>
    %186 = vector.broadcast %185 : vector<32x1xf32> to vector<32x32xf32>
    %187 = arith.mulf %184, %186 : vector<32x32xf32>
    %188 = arith.truncf %187 : vector<32x32xf32> to vector<32x32xbf16>
    %189 = tpu.concatenate %138, %145, %152, %159, %160, %167, %174, %181, %188 in 1 : vector<32x32xbf16>, vector<32x32xbf16>, vector<32x32xbf16>, vector<32x32xbf16>, vector<32x32xbf16>, vector<32x32xbf16>, vector<32x32xbf16>, vector<32x32xbf16>, vector<32x32xbf16> -> vector<32x288xbf16>
    %c528 = arith.constant 528 : index
    %c0_37 = arith.constant 0 : index
    %190 = vector.load %arg2[%c528, %c0_37] : memref<880x128xbf16, #tpu.memory_space<vmem>>, vector<288x128xbf16>
    %cst_38 = arith.constant dense<0.000000e+00> : vector<32x128xf32>
    %191 = tpu.matmul %189, %190, %cst_38 {dimension_numbers = #tpu.dot_dimension_numbers<[1], [0], [0], [1], [0, 0, 1, 1], [], []>} : vector<32x288xbf16>, vector<288x128xbf16>, vector<32x128xf32> -> vector<32x128xf32>
    %c3 = arith.constant 3 : index
    %c0_39 = arith.constant 0 : index
    %192 = vector.load %arg3[%c3, %c0_39] : memref<40x128xf32, #tpu.memory_space<vmem>>, vector<1x128xf32>
    %193 = vector.broadcast %192 : vector<1x128xf32> to vector<32x128xf32>
    %194 = arith.addf %191, %193 : vector<32x128xf32>
    %cst_40 = arith.constant 0.000000e+00 : f32
    %195 = vector.broadcast %cst_40 : f32 to vector<32x128xf32>
    %196 = arith.maximumf %194, %195 : vector<32x128xf32>
    %197 = vector.extract_strided_slice %196 {offsets = [0, 0], sizes = [32, 64], strides = [1, 1]} : vector<32x128xf32> to vector<32x64xf32>
    %198 = arith.addf %197, %2 : vector<32x64xf32>
    %c816 = arith.constant 816 : index
    %c0_41 = arith.constant 0 : index
    %199 = vector.load %arg2[%c816, %c0_41] : memref<880x128xbf16, #tpu.memory_space<vmem>>, vector<64x128xbf16>
    %200 = arith.truncf %198 : vector<32x64xf32> to vector<32x64xbf16>
    %cst_42 = arith.constant dense<0.000000e+00> : vector<32x128xf32>
    %201 = tpu.matmul %200, %199, %cst_42 {dimension_numbers = #tpu.dot_dimension_numbers<[1], [0], [0], [1], [0, 0, 1, 1], [], []>} : vector<32x64xbf16>, vector<64x128xbf16>, vector<32x128xf32> -> vector<32x128xf32>
    %c4 = arith.constant 4 : index
    %c0_43 = arith.constant 0 : index
    %202 = vector.load %arg3[%c4, %c0_43] : memref<40x128xf32, #tpu.memory_space<vmem>>, vector<1x128xf32>
    %203 = vector.broadcast %202 : vector<1x128xf32> to vector<32x128xf32>
    %204 = arith.addf %201, %203 : vector<32x128xf32>
    %c0_44 = arith.constant 0 : index
    %c0_45 = arith.constant 0 : index
    %205 = vector.load %arg4[%c0_44, %c0_45] : memref<32x128xf32, #tpu.memory_space<vmem>>, vector<32x128xf32>
    tpu.vector_store %arg4[%c0_44, %c0_45], %204 {strides = array<i32>} : memref<32x128xf32, #tpu.memory_space<vmem>>, vector<32x128xf32>,
    return
  }
  func.func @transform_0(%arg0: i32) -> (i32, i32) {
    %c0_i32 = arith.constant 0 : i32
    %c0_i32_0 = arith.constant 0 : i32
    %c0_i32_1 = arith.constant 0 : i32
    return %c0_i32, %c0_i32_0 : i32, i32
  }
  func.func @transform_1(%arg0: i32) -> (i32, i32) {
    %c0_i32 = arith.constant 0 : i32
    %c0_i32_0 = arith.constant 0 : i32
    %c0_i32_1 = arith.constant 0 : i32
    return %c0_i32, %c0_i32_0 : i32, i32
  }
  func.func @transform_2(%arg0: i32) -> (i32, i32) {
    %c0_i32 = arith.constant 0 : i32
    %c0_i32_0 = arith.constant 0 : i32
    %c0_i32_1 = arith.constant 0 : i32
    return %c0_i32, %c0_i32_0 : i32, i32
  }
  func.func @transform_3(%arg0: i32) -> (i32, i32) {
    %c0_i32 = arith.constant 0 : i32
    %c0_i32_0 = arith.constant 0 : i32
    %c0_i32_1 = arith.constant 0 : i32
    return %c0_i32, %c0_i32_0 : i32, i32
  }
}

</mosaic_0001>

<llo_original>
// kernel: segmentator_forward.1
$region0: #{segmentator_forward.1}
  #allocation0 [shape = 'u32[]', space=smem, size = 0x4, offset = 0x4, fixed_abs, tag = 'smem constant byte address 0x4 - core index']
  #allocation1 [shape = 'u32[144,128]{1,0:T(1,128)}', space=vmem, size = 0x12000, scoped, tag = 'internal scratch']
  %s0 = inlined_call_operand.vmem [shape: bf16[32,64], index: 0, kind: input, shape index: {}]
  %s1 = inlined_call_operand.vmem [shape: bf16[880,128], index: 1, kind: input, shape index: {}]
  %s2 = inlined_call_operand.vmem [shape: f32[40,128], index: 2, kind: input, shape index: {}]
  %s3 = inlined_call_operand.vmem [shape: f32[32,128], index: 3, kind: output, shape index: {}]
  %s4 = sld [smem:[#allocation0]]
  $region22: #{segmentator_forward.1} parent=0
    _
  %s6 = ssub.s32 1, %s4
  %s7 = scalar_select 0, %s6, %s4
  // Predicated region
  $region2: #{segmentator_forward.1} parent=0 // pred_check
    _
  $region3: #{segmentator_forward.1} parent=0 // pred_check_branch
    %9 = sbr.rel (0) target = $region5
  $region4: #{segmentator_forward.1} parent=0 // pred_region
    _
  $region5: #{segmentator_forward.1} parent=0 // pred_fallthru
    _
  // Predicated region
  $region6: #{segmentator_forward.1} parent=0 // pred_check
    _
  $region7: #{segmentator_forward.1} parent=0 // pred_check_branch
    %11 = sbr.rel (0) target = $region9
  $region8: #{segmentator_forward.1} parent=0 // pred_region
    _
  $region9: #{segmentator_forward.1} parent=0 // pred_fallthru
    _
  // Predicated region
  $region10: #{segmentator_forward.1} parent=0 // pred_check
    _
  $region11: #{segmentator_forward.1} parent=0 // pred_check_branch
    %13 = sbr.rel (0) target = $region13
  $region12: #{segmentator_forward.1} parent=0 // pred_region
    _
  $region13: #{segmentator_forward.1} parent=0 // pred_fallthru
    _
  %v15 = vld [vmem:[%s2 + $0x8] sm:$0xff]
  %v16 = vld [vmem:[%s2 + $0x10] sm:$0xff]
  %v17 = vld [vmem:[%s2 + $0x18] sm:$0xff]
  %v18 = vld [vmem:[%s2 + $0x20] sm:$0xff]
  %v19 = vld [vmem:[%s0] sm:$0xf]
  %v20 = vld [vmem:[%s0 + $0x4] sm:$0xf]
  %v21 = vld [vmem:[%s0 + $0x8] sm:$0xf]
  %v22 = vld [vmem:[%s0 + $0xc] sm:$0xf]
  %v23 = vunpack.c.l.bf16 %v19
  %v24 = vunpack.c.l.bf16 %v20
  %v25 = vunpack.c.l.bf16 %v21
  %v26 = vunpack.c.l.bf16 %v22
  %vm31 = vcmask 1044480
  %v32 = vrot.slane %v23, 3
  %v33 = vrot.slane %v24, 3
  %v34 = vsel %vm31, %v32, %v33
  %v35 = vrot.slane %v25, 3
  %v36 = vsel %vm31, %v33, %v35
  %v37 = vrot.slane %v26, 3
  %v38 = vsel %vm31, %v35, %v37
  %v43 = vsel %vm31, 0.0, %v32
  %45 = vset.pattern.permute.xlu0 0
  %46 = vperm.xlu0 %45, %v15
  %v47 = vpop.permute.xlu0 %46
  %50 = vset.pattern.permute.xlu0 0
  %51 = vperm.xlu0 %50, %v16
  %v52 = vpop.permute.xlu0 %51
  %55 = vset.pattern.permute.xlu0 0
  %56 = vperm.xlu0 %55, %v17
  %v57 = vpop.permute.xlu0 %56
  %60 = vset.pattern.permute.xlu0 0
  %61 = vperm.xlu0 %60, %v18
  %v62 = vpop.permute.xlu0 %61
  %v64 = vmul.f32 %v43, %v47
  %v65 = vmul.f32 %v34, %v52
  %v66 = vmul.f32 %v36, %v57
  %v67 = vmul.f32 %v38, %v62
  %v68 = vpack.c.bf16 %v65, %v64
  %v69 = vpack.c.bf16 %v67, %v66
  %vm70 = vcmask 1043456
  %v71 = vrot.slane %v23, 4
  %v72 = vrot.slane %v24, 4
  %v73 = vsel %vm70, %v71, %v72
  %v74 = vrot.slane %v25, 4
  %v75 = vsel %vm70, %v72, %v74
  %v76 = vrot.slane %v26, 4
  %v77 = vsel %vm70, %v74, %v76
  %v82 = vsel %vm70, 0.0, %v71
  %83 = vset.pattern.permute.xlu0 1
  %84 = vperm.xlu0 %83, %v15
  %v85 = vpop.permute.xlu0 %84
  %87 = vset.pattern.permute.xlu0 1
  %88 = vperm.xlu0 %87, %v16
  %v89 = vpop.permute.xlu0 %88
  %91 = vset.pattern.permute.xlu0 1
  %92 = vperm.xlu0 %91, %v17
  %v93 = vpop.permute.xlu0 %92
  %95 = vset.pattern.permute.xlu0 1
  %96 = vperm.xlu0 %95, %v18
  %v97 = vpop.permute.xlu0 %96
  %v99 = vmul.f32 %v82, %v85
  %v100 = vmul.f32 %v73, %v89
  %v101 = vmul.f32 %v75, %v93
  %v102 = vmul.f32 %v77, %v97
  %v103 = vpack.c.bf16 %v100, %v99
  %v104 = vpack.c.bf16 %v102, %v101
  %vm105 = vcmask 1040384
  %v106 = vrot.slane %v23, 7
  %v107 = vrot.slane %v24, 7
  %v108 = vsel %vm105, %v106, %v107
  %v109 = vrot.slane %v25, 7
  %v110 = vsel %vm105, %v107, %v109
  %v111 = vrot.slane %v26, 7
  %v112 = vsel %vm105, %v109, %v111
  %v117 = vsel %vm105, 0.0, %v106
  %118 = vset.pattern.permute.xlu0 3
  %119 = vperm.xlu0 %118, %v15
  %v120 = vpop.permute.xlu0 %119
  %122 = vset.pattern.permute.xlu0 3
  %123 = vperm.xlu0 %122, %v16
  %v124 = vpop.permute.xlu0 %123
  %126 = vset.pattern.permute.xlu0 3
  %127 = vperm.xlu0 %126, %v17
  %v128 = vpop.permute.xlu0 %127
  %130 = vset.pattern.permute.xlu0 3
  %131 = vperm.xlu0 %130, %v18
  %v132 = vpop.permute.xlu0 %131
  %v134 = vmul.f32 %v117, %v120
  %v135 = vmul.f32 %v108, %v124
  %v136 = vmul.f32 %v110, %v128
  %v137 = vmul.f32 %v112, %v132
  %v138 = vpack.c.bf16 %v135, %v134
  %v139 = vpack.c.bf16 %v137, %v136
  %142 = vrot.lane.b32.xlu0 %v103, 64
  %v143 = vpop.permute.xlu0 %142
  %144 = vrot.lane.b32.xlu0 %v104, 64
  %v145 = vpop.permute.xlu0 %144
  %v150 = vunpack.c.l.b16 %v19
  %v151 = vunpack.c.l.b16 %v20
  %v152 = vunpack.c.l.b16 %v21
  %v153 = vunpack.c.l.b16 %v22
  %v154 = vpack.c.b16 %v151, %v150
  %v155 = vpack.c.b16 %v153, %v152
  %156 = vrot.lane.b32.xlu0 %v154, 64
  %v157 = vpop.permute.xlu0 %156
  %158 = vrot.lane.b32.xlu0 %v155, 64
  %v159 = vpop.permute.xlu0 %158
  %vm160 = vcmask 523264
  %v163 = vsel %vm160, %v68, %v143
  %v167 = vsel %vm160, %v69, %v145
  %v171 = vsel %vm160, %v138, %v157
  %v175 = vsel %vm160, %v139, %v159
  %v177 = vld [vmem:[%s1] sm:$0xf]
  %v178 = vld [vmem:[%s1 + $0x4] sm:$0xf]
  %v179 = vld [vmem:[%s1 + $0x8] sm:$0xf]
  %v180 = vld [vmem:[%s1 + $0xc] sm:$0xf]
  %v181 = vld [vmem:[%s1 + $0x10] sm:$0xf]
  %v182 = vld [vmem:[%s1 + $0x14] sm:$0xf]
  %v183 = vld [vmem:[%s1 + $0x18] sm:$0xf]
  %v184 = vld [vmem:[%s1 + $0x1c] sm:$0xf]
  %v185 = vld [vmem:[%s1 + $0x20] sm:$0xf]
  %v186 = vld [vmem:[%s1 + $0x24] sm:$0xf]
  %v187 = vld [vmem:[%s1 + $0x28] sm:$0xf]
  %v188 = vld [vmem:[%s1 + $0x2c] sm:$0xf]
  %v189 = vld [vmem:[%s1 + $0x30] sm:$0xf]
  %v190 = vld [vmem:[%s1 + $0x34] sm:$0xf]
  %v191 = vld [vmem:[%s1 + $0x38] sm:$0xf]
  %v192 = vld [vmem:[%s1 + $0x3c] sm:$0xf]
  %v193 = vld [vmem:[%s1 + $0x40] sm:$0xf]
  %v194 = vld [vmem:[%s1 + $0x44] sm:$0xf]
  %v195 = vld [vmem:[%s1 + $0x48] sm:$0xf]
  %v196 = vld [vmem:[%s1 + $0x4c] sm:$0xf]
  %v197 = vld [vmem:[%s1 + $0x50] sm:$0xf]
  %v198 = vld [vmem:[%s1 + $0x54] sm:$0xf]
  %v199 = vld [vmem:[%s1 + $0x58] sm:$0xf]
  %v200 = vld [vmem:[%s1 + $0x5c] sm:$0xf]
  %v201 = vld [vmem:[%s1 + $0x60] sm:$0xf]
  %v202 = vld [vmem:[%s1 + $0x64] sm:$0xf]
  %v203 = vld [vmem:[%s1 + $0x68] sm:$0xf]
  %v204 = vld [vmem:[%s1 + $0x6c] sm:$0xf]
  %v205 = vld [vmem:[%s1 + $0x70] sm:$0xf]
  %v206 = vld [vmem:[%s1 + $0x74] sm:$0xf]
  %v207 = vld [vmem:[%s1 + $0x78] sm:$0xf]
  %v208 = vld [vmem:[%s1 + $0x7c] sm:$0xf]
  %v209 = vld [vmem:[%s2] sm:$0x1]
  %v210 = vlaneseq
  %v211 = vshrl.u32 %v210, 7
  %v212 = vsub.s32 0, %v211
  %v213 = vrot.slane %v209, %v212
  %v246 = vunpack.c.l.b16 %v177
  %v247 = vunpack.c.l.b16 %v178
  %v248 = vunpack.c.l.b16 %v179
  %v249 = vunpack.c.l.b16 %v180
  %v250 = vunpack.c.l.b16 %v181
  %v251 = vunpack.c.l.b16 %v182
  %v252 = vunpack.c.l.b16 %v183
  %v253 = vunpack.c.l.b16 %v184
  %v254 = vunpack.c.l.b16 %v185
  %v255 = vunpack.c.l.b16 %v186
  %v256 = vunpack.c.l.b16 %v187
  %v257 = vunpack.c.l.b16 %v188
  %v258 = vunpack.c.l.b16 %v189
  %v259 = vunpack.c.l.b16 %v190
  %v260 = vunpack.c.l.b16 %v191
  %v261 = vunpack.c.l.b16 %v192
  %v262 = vunpack.c.l.b16 %v193
  %v263 = vunpack.c.l.b16 %v194
  %v264 = vunpack.c.l.b16 %v195
  %v265 = vunpack.c.l.b16 %v196
  %v266 = vunpack.c.l.b16 %v197
  %v267 = vunpack.c.l.b16 %v198
  %v268 = vunpack.c.l.b16 %v199
  %v269 = vunpack.c.l.b16 %v200
  %v270 = vunpack.c.l.b16 %v201
  %v271 = vunpack.c.l.b16 %v202
  %v272 = vunpack.c.l.b16 %v203
  %v273 = vunpack.c.l.b16 %v204
  %v274 = vunpack.c.l.b16 %v205
  %v275 = vunpack.c.l.b16 %v206
  %v276 = vunpack.c.l.b16 %v207
  %v277 = vunpack.c.l.b16 %v208
  %v278 = vpack.c.b16 %v247, %v246
  %v279 = vpack.c.b16 %v249, %v248
  %v280 = vpack.c.b16 %v251, %v250
  %v281 = vpack.c.b16 %v253, %v252
  %v282 = vpack.c.b16 %v255, %v254
  %v283 = vpack.c.b16 %v257, %v256
  %v284 = vpack.c.b16 %v259, %v258
  %v285 = vpack.c.b16 %v261, %v260
  %v286 = vpack.c.b16 %v263, %v262
  %v287 = vpack.c.b16 %v265, %v264
  %v288 = vpack.c.b16 %v267, %v266
  %v289 = vpack.c.b16 %v269, %v268
  %v290 = vpack.c.b16 %v271, %v270
  %v291 = vpack.c.b16 %v273, %v272
  %v292 = vpack.c.b16 %v275, %v274
  %v293 = vpack.c.b16 %v277, %v276
  %310 = vmatprep.subr.bf16.mxu0 0
  %311 = vmatpush1.bf16.msra.mxu0 %v278
  %312 = vmatprep.subr.bf16.mxu0 0
  %313 = vmatpush1.bf16.msra.mxu0 %v279
  %314 = vmatprep.subr.bf16.mxu0 0
  %315 = vmatpush1.bf16.msra.mxu0 %v280
  %316 = vmatprep.subr.bf16.mxu0 0
  %317 = vmatpush1.bf16.msra.mxu0 %v281
  %318 = vmatprep.subr.bf16.mxu0 0
  %319 = vmatpush1.bf16.msra.mxu0 %v282
  %320 = vmatprep.subr.bf16.mxu0 0
  %321 = vmatpush1.bf16.msra.mxu0 %v283
  %322 = vmatprep.subr.bf16.mxu0 0
  %323 = vmatpush1.bf16.msra.mxu0 %v284
  %324 = vmatprep.subr.bf16.mxu0 0
  %325 = vmatpush1.bf16.msra.mxu0 %v285
  %326 = vmatprep.subr.bf16.mxu0 0
  %327 = vmatpush1.bf16.msra.mxu0 %v286
  %328 = vmatprep.subr.bf16.mxu0 0
  %329 = vmatpush1.bf16.msra.mxu0 %v287
  %330 = vmatprep.subr.bf16.mxu0 0
  %331 = vmatpush1.bf16.msra.mxu0 %v288
  %332 = vmatprep.subr.bf16.mxu0 0
  %333 = vmatpush1.bf16.msra.mxu0 %v289
  %334 = vmatprep.subr.bf16.mxu0 0
  %335 = vmatpush1.bf16.msra.mxu0 %v290
  %336 = vmatprep.subr.bf16.mxu0 0
  %337 = vmatpush1.bf16.msra.mxu0 %v291
  %338 = vmatprep.subr.bf16.mxu0 0
  %339 = vmatpush1.bf16.msra.mxu0 %v292
  %340 = vmatprep.subr.bf16.mxu0 0
  %341 = vmatpush1.bf16.msra.mxu0 %v293
  %342 = vmatprep.mubr.bf16.mxu0 %v171
  %343 = vmatmul.mubr.bf16.gmra.mrb[0].mxu0 %v163
  %v344 = vpop.f32.mrb[0].mxu0
  %v345 = vadd.f32 %v213, %v344
  %v346 = vpop.f32.mrb[0].mxu0
  %v347 = vpop.f32.mrb[0].mxu0
  %v348 = vadd.f32 %v213, %v347
  %v349 = vpop.f32.mrb[0].mxu0
  %350 = vmatprep.mubr.bf16.mxu0 %v175
  %351 = vmatmul.mubr.bf16.gmra.mrb[0].mxu0 %v167
  %v352 = vpop.f32.mrb[0].mxu0
  %v353 = vadd.f32 %v213, %v352
  %v354 = vpop.f32.mrb[0].mxu0
  %v355 = vpop.f32.mrb[0].mxu0
  %v356 = vadd.f32 %v213, %v355
  %v357 = vpop.f32.mrb[0].mxu0
  %358 = vdwg.mxu0
  %v359 = vmax.f32 %v345, 0.0
  %v360 = vmax.f32 %v348, 0.0
  %v361 = vmax.f32 %v353, 0.0
  %v362 = vmax.f32 %v356, 0.0
  %v367 = vrot.slane %v359, 3
  %v368 = vrot.slane %v360, 3
  %v369 = vsel %vm31, %v367, %v368
  %v370 = vrot.slane %v361, 3
  %v371 = vsel %vm31, %v368, %v370
  %v372 = vrot.slane %v362, 3
  %v373 = vsel %vm31, %v370, %v372
  %v378 = vsel %vm31, 0.0, %v367
  %v379 = vmul.f32 %v378, %v47
  %v380 = vmul.f32 %v369, %v52
  %v381 = vmul.f32 %v371, %v57
  %v382 = vmul.f32 %v373, %v62
  %v383 = vpack.c.bf16 %v380, %v379
  %v384 = vpack.c.bf16 %v382, %v381
  %v385 = vrot.slane %v359, 4
  %v386 = vrot.slane %v360, 4
  %v387 = vsel %vm70, %v385, %v386
  %v388 = vrot.slane %v361, 4
  %v389 = vsel %vm70, %v386, %v388
  %v390 = vrot.slane %v362, 4
  %v391 = vsel %vm70, %v388, %v390
  %v396 = vsel %vm70, 0.0, %v385
  %v397 = vmul.f32 %v396, %v85
  %v398 = vmul.f32 %v387, %v89
  %v399 = vmul.f32 %v389, %v93
  %v400 = vmul.f32 %v391, %v97
  %v401 = vpack.c.bf16 %v398, %v397
  %v402 = vpack.c.bf16 %v400, %v399
  %v403 = vrot.slane %v359, 7
  %v404 = vrot.slane %v360, 7
  %v405 = vsel %vm105, %v403, %v404
  %v406 = vrot.slane %v361, 7
  %v407 = vsel %vm105, %v404, %v406
  %v408 = vrot.slane %v362, 7
  %v409 = vsel %vm105, %v406, %v408
  %v414 = vsel %vm105, 0.0, %v403
  %v415 = vmul.f32 %v414, %v120
  %v416 = vmul.f32 %v405, %v124
  %v417 = vmul.f32 %v407, %v128
  %v418 = vmul.f32 %v409, %v132
  %v419 = vpack.c.bf16 %v416, %v415
  %v420 = vpack.c.bf16 %v418, %v417
  %v421 = vpack.c.bf16 %v360, %v359
  %v422 = vpack.c.bf16 %v362, %v361
  %425 = vrot.lane.b32.xlu0 %v401, 32
  %v426 = vpop.permute.xlu0 %425
  %427 = vrot.lane.b32.xlu0 %v402, 32
  %v428 = vpop.permute.xlu0 %427
  %431 = vrot.lane.b32.xlu0 %v419, 64
  %v432 = vpop.permute.xlu0 %431
  %433 = vrot.lane.b32.xlu0 %v420, 64
  %v434 = vpop.permute.xlu0 %433
  %437 = vrot.lane.b32.xlu0 %v421, 96
  %v438 = vpop.permute.xlu0 %437
  %439 = vrot.lane.b32.xlu0 %v422, 96
  %v440 = vpop.permute.xlu0 %439
  %vm441 = vcmask 261120
  %v444 = vsel %vm441, %v383, %v426
  %v447 = vsel %vm441, %v384, %v428
  %v449 = vsel %vm160, %v444, %v432
  %v451 = vsel %vm160, %v447, %v434
  %vm452 = vcmask 785408
  %v454 = vsel %vm452, %v449, %v438
  %v457 = vsel %vm452, %v451, %v440
  %v459 = vld [vmem:[%s1 + $0x80] sm:$0xf]
  %v460 = vld [vmem:[%s1 + $0x84] sm:$0xf]
  %v461 = vld [vmem:[%s1 + $0x88] sm:$0xf]
  %v462 = vld [vmem:[%s1 + $0x8c] sm:$0xf]
  %v463 = vld [vmem:[%s1 + $0x90] sm:$0xf]
  %v464 = vld [vmem:[%s1 + $0x94] sm:$0xf]
  %v465 = vld [vmem:[%s1 + $0x98] sm:$0xf]
  %v466 = vld [vmem:[%s1 + $0x9c] sm:$0xf]
  %v467 = vld [vmem:[%s1 + $0xa0] sm:$0xf]
  %v468 = vld [vmem:[%s1 + $0xa4] sm:$0xf]
  %v469 = vld [vmem:[%s1 + $0xa8] sm:$0xf]
  %v470 = vld [vmem:[%s1 + $0xac] sm:$0xf]
  %v471 = vld [vmem:[%s1 + $0xb0] sm:$0xf]
  %v472 = vld [vmem:[%s1 + $0xb4] sm:$0xf]
  %v473 = vld [vmem:[%s1 + $0xb8] sm:$0xf]
  %v474 = vld [vmem:[%s1 + $0xbc] sm:$0xf]
  %v475 = vld [vmem:[%s2 + $0x1] sm:$0x1]
  %v476 = vlaneseq
  %v477 = vshrl.u32 %v476, 7
  %v478 = vsub.s32 0, %v477
  %v479 = vrot.slane %v475, %v478
  %v496 = vunpack.c.l.b16 %v459
  %v497 = vunpack.c.l.b16 %v460
  %v498 = vunpack.c.l.b16 %v461
  %v499 = vunpack.c.l.b16 %v462
  %v500 = vunpack.c.l.b16 %v463
  %v501 = vunpack.c.l.b16 %v464
  %v502 = vunpack.c.l.b16 %v465
  %v503 = vunpack.c.l.b16 %v466
  %v504 = vunpack.c.l.b16 %v467
  %v505 = vunpack.c.l.b16 %v468
  %v506 = vunpack.c.l.b16 %v469
  %v507 = vunpack.c.l.b16 %v470
  %v508 = vunpack.c.l.b16 %v471
  %v509 = vunpack.c.l.b16 %v472
  %v510 = vunpack.c.l.b16 %v473
  %v511 = vunpack.c.l.b16 %v474
  %v512 = vpack.c.b16 %v497, %v496
  %v513 = vpack.c.b16 %v499, %v498
  %v514 = vpack.c.b16 %v501, %v500
  %v515 = vpack.c.b16 %v503, %v502
  %v516 = vpack.c.b16 %v505, %v504
  %v517 = vpack.c.b16 %v507, %v506
  %v518 = vpack.c.b16 %v509, %v508
  %v519 = vpack.c.b16 %v511, %v510
  %528 = vmatprep.subr.bf16.mxu0 0
  %529 = vmatpush1.bf16.msra.mxu0 %v512
  %530 = vmatprep.subr.bf16.mxu0 0
  %531 = vmatpush1.bf16.msra.mxu0 %v513
  %532 = vmatprep.subr.bf16.mxu0 0
  %533 = vmatpush1.bf16.msra.mxu0 %v514
  %534 = vmatprep.subr.bf16.mxu0 0
  %535 = vmatpush1.bf16.msra.mxu0 %v515
  %536 = vmatprep.subr.bf16.mxu0 0
  %537 = vmatpush1.bf16.msra.mxu0 %v516
  %538 = vmatprep.subr.bf16.mxu0 0
  %539 = vmatpush1.bf16.msra.mxu0 %v517
  %540 = vmatprep.subr.bf16.mxu0 0
  %541 = vmatpush1.bf16.msra.mxu0 %v518
  %542 = vmatprep.subr.bf16.mxu0 0
  %543 = vmatpush1.bf16.msra.mxu0 %v519
  %544 = vmatprep.subr.bf16.mxu0 0
  %545 = vmatpush1.bf16.msra.mxu0 0
  %546 = vmatprep.subr.bf16.mxu0 0
  %547 = vmatpush1.bf16.msra.mxu0 0
  %548 = vmatprep.subr.bf16.mxu0 0
  %549 = vmatpush1.bf16.msra.mxu0 0
  %550 = vmatprep.subr.bf16.mxu0 0
  %551 = vmatpush1.bf16.msra.mxu0 0
  %552 = vmatprep.subr.bf16.mxu0 0
  %553 = vmatpush1.bf16.msra.mxu0 0
  %554 = vmatprep.subr.bf16.mxu0 0
  %555 = vmatpush1.bf16.msra.mxu0 0
  %556 = vmatprep.subr.bf16.mxu0 0
  %557 = vmatpush1.bf16.msra.mxu0 0
  %558 = vmatprep.subr.bf16.mxu0 0
  %559 = vmatpush1.bf16.msra.mxu0 0
  %560 = vmatprep.mubr.bf16.mxu0 0
  %561 = vmatmul.mubr.bf16.gmra.mrb[0].mxu0 %v454
  %v562 = vpop.f32.mrb[0].mxu0
  %v563 = vadd.f32 %v479, %v562
  %v564 = vpop.f32.mrb[0].mxu0
  %v565 = vpop.f32.mrb[0].mxu0
  %v566 = vadd.f32 %v479, %v565
  %v567 = vpop.f32.mrb[0].mxu0
  %568 = vmatprep.mubr.bf16.mxu0 0
  %569 = vmatmul.mubr.bf16.gmra.mrb[0].mxu0 %v457
  %v570 = vpop.f32.mrb[0].mxu0
  %v571 = vadd.f32 %v479, %v570
  %v572 = vpop.f32.mrb[0].mxu0
  %v573 = vpop.f32.mrb[0].mxu0
  %v574 = vadd.f32 %v479, %v573
  %v575 = vpop.f32.mrb[0].mxu0
  %576 = vdwg.mxu0
  %v577 = vmax.f32 %v563, 0.0
  %v578 = vmax.f32 %v566, 0.0
  %v579 = vmax.f32 %v571, 0.0
  %v580 = vmax.f32 %v574, 0.0
  %v585 = vrot.slane %v577, 3
  %v586 = vrot.slane %v578, 3
  %v587 = vsel %vm31, %v585, %v586
  %v588 = vrot.slane %v579, 3
  %v589 = vsel %vm31, %v586, %v588
  %v590 = vrot.slane %v580, 3
  %v591 = vsel %vm31, %v588, %v590
  %v596 = vsel %vm31, 0.0, %v585
  %v597 = vmul.f32 %v596, %v47
  %v598 = vmul.f32 %v587, %v52
  %v599 = vmul.f32 %v589, %v57
  %v600 = vmul.f32 %v591, %v62
  %v601 = vpack.c.bf16 %v598, %v597
  %v602 = vpack.c.bf16 %v600, %v599
  %v603 = vrot.slane %v577, 4
  %v604 = vrot.slane %v578, 4
  %v605 = vsel %vm70, %v603, %v604
  %v606 = vrot.slane %v579, 4
  %v607 = vsel %vm70, %v604, %v606
  %v608 = vrot.slane %v580, 4
  %v609 = vsel %vm70, %v606, %v608
  %v614 = vsel %vm70, 0.0, %v603
  %v615 = vmul.f32 %v614, %v85
  %v616 = vmul.f32 %v605, %v89
  %v617 = vmul.f32 %v607, %v93
  %v618 = vmul.f32 %v609, %v97
  %v619 = vpack.c.bf16 %v616, %v615
  %v620 = vpack.c.bf16 %v618, %v617
  %vm621 = vcmask 1042432
  %v622 = vrot.slane %v577, 5
  %v623 = vrot.slane %v578, 5
  %v624 = vsel %vm621, %v622, %v623
  %v625 = vrot.slane %v579, 5
  %v626 = vsel %vm621, %v623, %v625
  %v627 = vrot.slane %v580, 5
  %v628 = vsel %vm621, %v625, %v627
  %v633 = vsel %vm621, 0.0, %v622
  %634 = vset.pattern.permute.xlu0 2
  %635 = vperm.xlu0 %634, %v15
  %v636 = vpop.permute.xlu0 %635
  %638 = vset.pattern.permute.xlu0 2
  %639 = vperm.xlu0 %638, %v16
  %v640 = vpop.permute.xlu0 %639
  %642 = vset.pattern.permute.xlu0 2
  %643 = vperm.xlu0 %642, %v17
  %v644 = vpop.permute.xlu0 %643
  %646 = vset.pattern.permute.xlu0 2
  %647 = vperm.xlu0 %646, %v18
  %v648 = vpop.permute.xlu0 %647
  %v650 = vmul.f32 %v633, %v636
  %v651 = vmul.f32 %v624, %v640
  %v652 = vmul.f32 %v626, %v644
  %v653 = vmul.f32 %v628, %v648
  %v654 = vpack.c.bf16 %v651, %v650
  %v655 = vpack.c.bf16 %v653, %v652
  %v656 = vrot.slane %v577, 7
  %v657 = vrot.slane %v578, 7
  %v658 = vsel %vm105, %v656, %v657
  %v659 = vrot.slane %v579, 7
  %v660 = vsel %vm105, %v657, %v659
  %v661 = vrot.slane %v580, 7
  %v662 = vsel %vm105, %v659, %v661
  %v667 = vsel %vm105, 0.0, %v656
  %v668 = vmul.f32 %v667, %v120
  %v669 = vmul.f32 %v658, %v124
  %v670 = vmul.f32 %v660, %v128
  %v671 = vmul.f32 %v662, %v132
  %v672 = vpack.c.bf16 %v669, %v668
  %v673 = vpack.c.bf16 %v671, %v670
  %v674 = vpack.c.bf16 %v578, %v577
  %v675 = vpack.c.bf16 %v580, %v579
  %vm676 = vcmask 1046528
  %v677 = vrot.slane %v577, 1
  %v678 = vrot.slane %v578, 1
  %v679 = vsel %vm676, %v677, %v678
  %v680 = vrot.slane %v579, 1
  %v681 = vsel %vm676, %v678, %v680
  %v682 = vrot.slane %v580, 1
  %v683 = vsel %vm676, %v680, %v682
  %v688 = vsel %vm676, %v682, 0.0
  %689 = vset.pattern.permute.xlu0 5
  %690 = vperm.xlu0 %689, %v15
  %v691 = vpop.permute.xlu0 %690
  %693 = vset.pattern.permute.xlu0 5
  %694 = vperm.xlu0 %693, %v16
  %v695 = vpop.permute.xlu0 %694
  %697 = vset.pattern.permute.xlu0 5
  %698 = vperm.xlu0 %697, %v17
  %v699 = vpop.permute.xlu0 %698
  %701 = vset.pattern.permute.xlu0 5
  %702 = vperm.xlu0 %701, %v18
  %v703 = vpop.permute.xlu0 %702
  %v705 = vmul.f32 %v679, %v691
  %v706 = vmul.f32 %v681, %v695
  %v707 = vmul.f32 %v683, %v699
  %v708 = vmul.f32 %v688, %v703
  %v709 = vpack.c.bf16 %v706, %v705
  %v710 = vpack.c.bf16 %v708, %v707
  %v712 = vsel %vm31, %v590, 0.0
  %713 = vset.pattern.permute.xlu0 6
  %714 = vperm.xlu0 %713, %v15
  %v715 = vpop.permute.xlu0 %714
  %717 = vset.pattern.permute.xlu0 6
  %718 = vperm.xlu0 %717, %v16
  %v719 = vpop.permute.xlu0 %718
  %721 = vset.pattern.permute.xlu0 6
  %722 = vperm.xlu0 %721, %v17
  %v723 = vpop.permute.xlu0 %722
  %725 = vset.pattern.permute.xlu0 6
  %726 = vperm.xlu0 %725, %v18
  %v727 = vpop.permute.xlu0 %726
  %v729 = vmul.f32 %v587, %v715
  %v730 = vmul.f32 %v589, %v719
  %v731 = vmul.f32 %v591, %v723
  %v732 = vmul.f32 %v712, %v727
  %v733 = vpack.c.bf16 %v730, %v729
  %v734 = vpack.c.bf16 %v732, %v731
  %v736 = vsel %vm70, %v608, 0.0
  %737 = vset.pattern.permute.xlu0 7
  %738 = vperm.xlu0 %737, %v15
  %v739 = vpop.permute.xlu0 %738
  %741 = vset.pattern.permute.xlu0 7
  %742 = vperm.xlu0 %741, %v16
  %v743 = vpop.permute.xlu0 %742
  %745 = vset.pattern.permute.xlu0 7
  %746 = vperm.xlu0 %745, %v17
  %v747 = vpop.permute.xlu0 %746
  %749 = vset.pattern.permute.xlu0 7
  %750 = vperm.xlu0 %749, %v18
  %v751 = vpop.permute.xlu0 %750
  %v753 = vmul.f32 %v605, %v739
  %v754 = vmul.f32 %v607, %v743
  %v755 = vmul.f32 %v609, %v747
  %v756 = vmul.f32 %v736, %v751
  %v757 = vpack.c.bf16 %v754, %v753
  %v758 = vpack.c.bf16 %v756, %v755
  %v760 = vsel %vm621, %v627, 0.0
  %761 = vset.pattern.permute.xlu0 8
  %762 = vperm.xlu0 %761, %v15
  %v763 = vpop.permute.xlu0 %762
  %765 = vset.pattern.permute.xlu0 8
  %766 = vperm.xlu0 %765, %v16
  %v767 = vpop.permute.xlu0 %766
  %769 = vset.pattern.permute.xlu0 8
  %770 = vperm.xlu0 %769, %v17
  %v771 = vpop.permute.xlu0 %770
  %773 = vset.pattern.permute.xlu0 8
  %774 = vperm.xlu0 %773, %v18
  %v775 = vpop.permute.xlu0 %774
  %v777 = vmul.f32 %v624, %v763
  %v778 = vmul.f32 %v626, %v767
  %v779 = vmul.f32 %v628, %v771
  %v780 = vmul.f32 %v760, %v775
  %v781 = vpack.c.bf16 %v778, %v777
  %v782 = vpack.c.bf16 %v780, %v779
  %785 = vrot.lane.b32.xlu0 %v619, 16
  %v786 = vpop.permute.xlu0 %785
  %787 = vrot.lane.b32.xlu0 %v620, 16
  %v788 = vpop.permute.xlu0 %787
  %791 = vrot.lane.b32.xlu0 %v654, 32
  %v792 = vpop.permute.xlu0 %791
  %793 = vrot.lane.b32.xlu0 %v655, 32
  %v794 = vpop.permute.xlu0 %793
  %797 = vrot.lane.b32.xlu0 %v672, 48
  %v798 = vpop.permute.xlu0 %797
  %799 = vrot.lane.b32.xlu0 %v673, 48
  %v800 = vpop.permute.xlu0 %799
  %803 = vrot.lane.b32.xlu0 %v674, 64
  %v804 = vpop.permute.xlu0 %803
  %805 = vrot.lane.b32.xlu0 %v675, 64
  %v806 = vpop.permute.xlu0 %805
  %809 = vrot.lane.b32.xlu0 %v709, 80
  %v810 = vpop.permute.xlu0 %809
  %811 = vrot.lane.b32.xlu0 %v710, 80
  %v812 = vpop.permute.xlu0 %811
  %815 = vrot.lane.b32.xlu0 %v733, 96
  %v816 = vpop.permute.xlu0 %815
  %817 = vrot.lane.b32.xlu0 %v734, 96
  %v818 = vpop.permute.xlu0 %817
  %821 = vrot.lane.b32.xlu0 %v757, 112
  %v822 = vpop.permute.xlu0 %821
  %823 = vrot.lane.b32.xlu0 %v758, 112
  %v824 = vpop.permute.xlu0 %823
  %vm825 = vcmask 130048
  %v828 = vsel %vm825, %v601, %v786
  %v831 = vsel %vm825, %v602, %v788
  %v833 = vsel %vm441, %v828, %v792
  %v835 = vsel %vm441, %v831, %v794
  %vm836 = vcmask 392192
  %v838 = vsel %vm836, %v833, %v798
  %v840 = vsel %vm836, %v835, %v800
  %v842 = vsel %vm160, %v838, %v804
  %v844 = vsel %vm160, %v840, %v806
  %vm845 = vcmask 654336
  %v847 = vsel %vm845, %v842, %v810
  %v849 = vsel %vm845, %v844, %v812
  %v851 = vsel %vm452, %v847, %v816
  %v853 = vsel %vm452, %v849, %v818
  %vm854 = vcmask 916480
  %v856 = vsel %vm854, %v851, %v822
  %v859 = vsel %vm854, %v853, %v824
  %v861 = vld [vmem:[%s1 + $0xc0] sm:$0xf]
  %v862 = vld [vmem:[%s1 + $0xc4] sm:$0xf]
  %v863 = vld [vmem:[%s1 + $0xc8] sm:$0xf]
  %v864 = vld [vmem:[%s1 + $0xcc] sm:$0xf]
  %v865 = vld [vmem:[%s1 + $0xd0] sm:$0xf]
  %v866 = vld [vmem:[%s1 + $0xd4] sm:$0xf]
  %v867 = vld [vmem:[%s1 + $0xd8] sm:$0xf]
  %v868 = vld [vmem:[%s1 + $0xdc] sm:$0xf]
  %v869 = vld [vmem:[%s1 + $0xe0] sm:$0xf]
  %v870 = vld [vmem:[%s1 + $0xe4] sm:$0xf]
  %v871 = vld [vmem:[%s1 + $0xe8] sm:$0xf]
  %v872 = vld [vmem:[%s1 + $0xec] sm:$0xf]
  %v873 = vld [vmem:[%s1 + $0xf0] sm:$0xf]
  %v874 = vld [vmem:[%s1 + $0xf4] sm:$0xf]
  %v875 = vld [vmem:[%s1 + $0xf8] sm:$0xf]
  %v876 = vld [vmem:[%s1 + $0xfc] sm:$0xf]
  %v877 = vld [vmem:[%s1 + $0x100] sm:$0xf]
  %v878 = vld [vmem:[%s1 + $0x104] sm:$0xf]
  %v879 = vld [vmem:[%s2 + $0x2] sm:$0x1]
  %v880 = vlaneseq
  %v881 = vshrl.u32 %v880, 7
  %v882 = vsub.s32 0, %v881
  %v883 = vrot.slane %v879, %v882
  %v902 = vunpack.c.l.b16 %v861
  %v903 = vunpack.c.l.b16 %v862
  %v904 = vunpack.c.l.b16 %v863
  %v905 = vunpack.c.l.b16 %v864
  %v906 = vunpack.c.l.b16 %v865
  %v907 = vunpack.c.l.b16 %v866
  %v908 = vunpack.c.l.b16 %v867
  %v909 = vunpack.c.l.b16 %v868
  %v910 = vunpack.c.l.b16 %v869
  %v911 = vunpack.c.l.b16 %v870
  %v912 = vunpack.c.l.b16 %v871
  %v913 = vunpack.c.l.b16 %v872
  %v914 = vunpack.c.l.b16 %v873
  %v915 = vunpack.c.l.b16 %v874
  %v916 = vunpack.c.l.b16 %v875
  %v917 = vunpack.c.l.b16 %v876
  %v918 = vunpack.c.l.b16 %v877
  %v919 = vunpack.c.l.b16 %v878
  %v920 = vpack.c.b16 %v903, %v902
  %v921 = vpack.c.b16 %v905, %v904
  %v922 = vpack.c.b16 %v907, %v906
  %v923 = vpack.c.b16 %v909, %v908
  %v924 = vpack.c.b16 %v911, %v910
  %v925 = vpack.c.b16 %v913, %v912
  %v926 = vpack.c.b16 %v915, %v914
  %v927 = vpack.c.b16 %v917, %v916
  %v928 = vpack.c.b16 %v919, %v918
  %v939 = vsel %vm825, %v781, 0
  %v942 = vsel %vm825, %v782, 0
  %944 = vmatprep.subr.bf16.mxu0 0
  %945 = vmatpush1.bf16.msra.mxu0 %v920
  %946 = vmatprep.subr.bf16.mxu0 0
  %947 = vmatpush1.bf16.msra.mxu0 %v921
  %948 = vmatprep.subr.bf16.mxu0 0
  %949 = vmatpush1.bf16.msra.mxu0 %v922
  %950 = vmatprep.subr.bf16.mxu0 0
  %951 = vmatpush1.bf16.msra.mxu0 %v923
  %952 = vmatprep.subr.bf16.mxu0 0
  %953 = vmatpush1.bf16.msra.mxu0 %v924
  %954 = vmatprep.subr.bf16.mxu0 0
  %955 = vmatpush1.bf16.msra.mxu0 %v925
  %956 = vmatprep.subr.bf16.mxu0 0
  %957 = vmatpush1.bf16.msra.mxu0 %v926
  %958 = vmatprep.subr.bf16.mxu0 0
  %959 = vmatpush1.bf16.msra.mxu0 %v927
  %960 = vmatprep.subr.bf16.mxu0 0
  %961 = vmatpush1.bf16.msra.mxu0 %v928
  %962 = vmatprep.subr.bf16.mxu0 0
  %963 = vmatpush1.bf16.msra.mxu0 0
  %964 = vmatprep.subr.bf16.mxu0 0
  %965 = vmatpush1.bf16.msra.mxu0 0
  %966 = vmatprep.subr.bf16.mxu0 0
  %967 = vmatpush1.bf16.msra.mxu0 0
  %968 = vmatprep.subr.bf16.mxu0 0
  %969 = vmatpush1.bf16.msra.mxu0 0
  %970 = vmatprep.subr.bf16.mxu0 0
  %971 = vmatpush1.bf16.msra.mxu0 0
  %972 = vmatprep.subr.bf16.mxu0 0
  %973 = vmatpush1.bf16.msra.mxu0 0
  %974 = vmatprep.subr.bf16.mxu0 0
  %975 = vmatpush1.bf16.msra.mxu0 0
  %976 = vmatprep.mubr.bf16.mxu0 %v939
  %977 = vmatmul.mubr.bf16.gmra.mrb[0].mxu0 %v856
  %v978 = vpop.f32.mrb[0].mxu0
  %v979 = vadd.f32 %v883, %v978
  %v980 = vpop.f32.mrb[0].mxu0
  %v981 = vpop.f32.mrb[0].mxu0
  %v982 = vadd.f32 %v883, %v981
  %v983 = vpop.f32.mrb[0].mxu0
  %984 = vmatprep.mubr.bf16.mxu0 %v942
  %985 = vmatmul.mubr.bf16.gmra.mrb[0].mxu0 %v859
  %v986 = vpop.f32.mrb[0].mxu0
  %v987 = vadd.f32 %v883, %v986
  %v988 = vpop.f32.mrb[0].mxu0
  %v989 = vpop.f32.mrb[0].mxu0
  %v990 = vadd.f32 %v883, %v989
  %v991 = vpop.f32.mrb[0].mxu0
  %992 = vdwg.mxu0
  %v993 = vmax.f32 %v979, 0.0
  %v994 = vmax.f32 %v982, 0.0
  %v995 = vmax.f32 %v987, 0.0
  %v996 = vmax.f32 %v990, 0.0
  %v997 = vadd.f32 %v993, %v359
  %v998 = vadd.f32 %v994, %v360
  %v999 = vadd.f32 %v995, %v361
  %v1000 = vadd.f32 %v996, %v362
  %v1005 = vrot.slane %v997, 3
  %v1006 = vrot.slane %v998, 3
  %v1007 = vsel %vm31, %v1005, %v1006
  %v1008 = vrot.slane %v999, 3
  %v1009 = vsel %vm31, %v1006, %v1008
  %v1010 = vrot.slane %v1000, 3
  %v1011 = vsel %vm31, %v1008, %v1010
  %v1016 = vsel %vm31, 0.0, %v1005
  %v1017 = vmul.f32 %v1016, %v47
  %v1018 = vmul.f32 %v1007, %v52
  %v1019 = vmul.f32 %v1009, %v57
  %v1020 = vmul.f32 %v1011, %v62
  %v1021 = vpack.c.bf16 %v1018, %v1017
  %v1022 = vpack.c.bf16 %v1020, %v1019
  %v1023 = vrot.slane %v997, 4
  %v1024 = vrot.slane %v998, 4
  %v1025 = vsel %vm70, %v1023, %v1024
  %v1026 = vrot.slane %v999, 4
  %v1027 = vsel %vm70, %v1024, %v1026
  %v1028 = vrot.slane %v1000, 4
  %v1029 = vsel %vm70, %v1026, %v1028
  %v1034 = vsel %vm70, 0.0, %v1023
  %v1035 = vmul.f32 %v1034, %v85
  %v1036 = vmul.f32 %v1025, %v89
  %v1037 = vmul.f32 %v1027, %v93
  %v1038 = vmul.f32 %v1029, %v97
  %v1039 = vpack.c.bf16 %v1036, %v1035
  %v1040 = vpack.c.bf16 %v1038, %v1037
  %v1041 = vrot.slane %v997, 5
  %v1042 = vrot.slane %v998, 5
  %v1043 = vsel %vm621, %v1041, %v1042
  %v1044 = vrot.slane %v999, 5
  %v1045 = vsel %vm621, %v1042, %v1044
  %v1046 = vrot.slane %v1000, 5
  %v1047 = vsel %vm621, %v1044, %v1046
  %v1052 = vsel %vm621, 0.0, %v1041
  %v1053 = vmul.f32 %v1052, %v636
  %v1054 = vmul.f32 %v1043, %v640
  %v1055 = vmul.f32 %v1045, %v644
  %v1056 = vmul.f32 %v1047, %v648
  %v1057 = vpack.c.bf16 %v1054, %v1053
  %v1058 = vpack.c.bf16 %v1056, %v1055
  %v1059 = vrot.slane %v997, 7
  %v1060 = vrot.slane %v998, 7
  %v1061 = vsel %vm105, %v1059, %v1060
  %v1062 = vrot.slane %v999, 7
  %v1063 = vsel %vm105, %v1060, %v1062
  %v1064 = vrot.slane %v1000, 7
  %v1065 = vsel %vm105, %v1062, %v1064
  %v1070 = vsel %vm105, 0.0, %v1059
  %v1071 = vmul.f32 %v1070, %v120
  %v1072 = vmul.f32 %v1061, %v124
  %v1073 = vmul.f32 %v1063, %v128
  %v1074 = vmul.f32 %v1065, %v132
  %v1075 = vpack.c.bf16 %v1072, %v1071
  %v1076 = vpack.c.bf16 %v1074, %v1073
  %v1077 = vpack.c.bf16 %v998, %v997
  %v1078 = vpack.c.bf16 %v1000, %v999
  %v1079 = vrot.slane %v997, 1
  %v1080 = vrot.slane %v998, 1
  %v1081 = vsel %vm676, %v1079, %v1080
  %v1082 = vrot.slane %v999, 1
  %v1083 = vsel %vm676, %v1080, %v1082
  %v1084 = vrot.slane %v1000, 1
  %v1085 = vsel %vm676, %v1082, %v1084
  %v1090 = vsel %vm676, %v1084, 0.0
  %v1091 = vmul.f32 %v1081, %v691
  %v1092 = vmul.f32 %v1083, %v695
  %v1093 = vmul.f32 %v1085, %v699
  %v1094 = vmul.f32 %v1090, %v703
  %v1095 = vpack.c.bf16 %v1092, %v1091
  %v1096 = vpack.c.bf16 %v1094, %v1093
  %v1098 = vsel %vm31, %v1010, 0.0
  %v1099 = vmul.f32 %v1007, %v715
  %v1100 = vmul.f32 %v1009, %v719
  %v1101 = vmul.f32 %v1011, %v723
  %v1102 = vmul.f32 %v1098, %v727
  %v1103 = vpack.c.bf16 %v1100, %v1099
  %v1104 = vpack.c.bf16 %v1102, %v1101
  %v1106 = vsel %vm70, %v1028, 0.0
  %v1107 = vmul.f32 %v1025, %v739
  %v1108 = vmul.f32 %v1027, %v743
  %v1109 = vmul.f32 %v1029, %v747
  %v1110 = vmul.f32 %v1106, %v751
  %v1111 = vpack.c.bf16 %v1108, %v1107
  %v1112 = vpack.c.bf16 %v1110, %v1109
  %v1114 = vsel %vm621, %v1046, 0.0
  %v1115 = vmul.f32 %v1043, %v763
  %v1116 = vmul.f32 %v1045, %v767
  %v1117 = vmul.f32 %v1047, %v771
  %v1118 = vmul.f32 %v1114, %v775
  %v1119 = vpack.c.bf16 %v1116, %v1115
  %v1120 = vpack.c.bf16 %v1118, %v1117
  %1123 = vrot.lane.b32.xlu0 %v1039, 32
  %v1124 = vpop.permute.xlu0 %1123
  %1125 = vrot.lane.b32.xlu0 %v1040, 32
  %v1126 = vpop.permute.xlu0 %1125
  %1129 = vrot.lane.b32.xlu0 %v1057, 64
  %v1130 = vpop.permute.xlu0 %1129
  %1131 = vrot.lane.b32.xlu0 %v1058, 64
  %v1132 = vpop.permute.xlu0 %1131
  %1135 = vrot.lane.b32.xlu0 %v1075, 96
  %v1136 = vpop.permute.xlu0 %1135
  %1137 = vrot.lane.b32.xlu0 %v1076, 96
  %v1138 = vpop.permute.xlu0 %1137
  %1141 = vrot.lane.b32.xlu0 %v1095, 32
  %v1142 = vpop.permute.xlu0 %1141
  %1143 = vrot.lane.b32.xlu0 %v1096, 32
  %v1144 = vpop.permute.xlu0 %1143
  %1147 = vrot.lane.b32.xlu0 %v1103, 64
  %v1148 = vpop.permute.xlu0 %1147
  %1149 = vrot.lane.b32.xlu0 %v1104, 64
  %v1150 = vpop.permute.xlu0 %1149
  %1153 = vrot.lane.b32.xlu0 %v1111, 96
  %v1154 = vpop.permute.xlu0 %1153
  %1155 = vrot.lane.b32.xlu0 %v1112, 96
  %v1156 = vpop.permute.xlu0 %1155
  %v1159 = vsel %vm441, %v1021, %v1124
  %v1162 = vsel %vm441, %v1022, %v1126
  %v1164 = vsel %vm160, %v1159, %v1130
  %v1166 = vsel %vm160, %v1162, %v1132
  %v1168 = vsel %vm452, %v1164, %v1136
  %v1171 = vsel %vm452, %v1166, %v1138
  %v1175 = vsel %vm441, %v1077, %v1142
  %v1178 = vsel %vm441, %v1078, %v1144
  %v1180 = vsel %vm160, %v1175, %v1148
  %v1182 = vsel %vm160, %v1178, %v1150
  %v1184 = vsel %vm452, %v1180, %v1154
  %v1187 = vsel %vm452, %v1182, %v1156
  %v1189 = vld [vmem:[%s1 + $0x108] sm:$0xf]
  %v1190 = vld [vmem:[%s1 + $0x10c] sm:$0xf]
  %v1191 = vld [vmem:[%s1 + $0x110] sm:$0xf]
  %v1192 = vld [vmem:[%s1 + $0x114] sm:$0xf]
  %v1193 = vld [vmem:[%s1 + $0x118] sm:$0xf]
  %v1194 = vld [vmem:[%s1 + $0x11c] sm:$0xf]
  %v1195 = vld [vmem:[%s1 + $0x120] sm:$0xf]
  %v1196 = vld [vmem:[%s1 + $0x124] sm:$0xf]
  %v1197 = vld [vmem:[%s1 + $0x128] sm:$0xf]
  %v1198 = vld [vmem:[%s1 + $0x12c] sm:$0xf]
  %v1199 = vld [vmem:[%s1 + $0x130] sm:$0xf]
  %v1200 = vld [vmem:[%s1 + $0x134] sm:$0xf]
  %v1201 = vld [vmem:[%s1 + $0x138] sm:$0xf]
  %v1202 = vld [vmem:[%s1 + $0x13c] sm:$0xf]
  %v1203 = vld [vmem:[%s1 + $0x140] sm:$0xf]
  %v1204 = vld [vmem:[%s1 + $0x144] sm:$0xf]
  %v1205 = vld [vmem:[%s1 + $0x148] sm:$0xf]
  %v1206 = vld [vmem:[%s1 + $0x14c] sm:$0xf]
  %v1207 = vld [vmem:[%s1 + $0x150] sm:$0xf]
  %v1208 = vld [vmem:[%s1 + $0x154] sm:$0xf]
  %v1209 = vld [vmem:[%s1 + $0x158] sm:$0xf]
  %v1210 = vld [vmem:[%s1 + $0x15c] sm:$0xf]
  %v1211 = vld [vmem:[%s1 + $0x160] sm:$0xf]
  %v1212 = vld [vmem:[%s1 + $0x164] sm:$0xf]
  %v1213 = vld [vmem:[%s1 + $0x168] sm:$0xf]
  %v1214 = vld [vmem:[%s1 + $0x16c] sm:$0xf]
  %v1215 = vld [vmem:[%s1 + $0x170] sm:$0xf]
  %v1216 = vld [vmem:[%s1 + $0x174] sm:$0xf]
  %v1217 = vld [vmem:[%s1 + $0x178] sm:$0xf]
  %v1218 = vld [vmem:[%s1 + $0x17c] sm:$0xf]
  %v1219 = vld [vmem:[%s1 + $0x180] sm:$0xf]
  %v1220 = vld [vmem:[%s1 + $0x184] sm:$0xf]
  %v1221 = vld [vmem:[%s1 + $0x188] sm:$0xf]
  %v1222 = vld [vmem:[%s1 + $0x18c] sm:$0xf]
  %v1223 = vld [vmem:[%s1 + $0x190] sm:$0xf]
  %v1224 = vld [vmem:[%s1 + $0x194] sm:$0xf]
  %v1225 = vld [vmem:[%s2 + $0x3] sm:$0x1]
  %v1226 = vlaneseq
  %v1227 = vshrl.u32 %v1226, 7
  %v1228 = vsub.s32 0, %v1227
  %v1229 = vrot.slane %v1225, %v1228
  %v1266 = vunpack.c.l.b16 %v1189
  %v1267 = vunpack.c.l.b16 %v1190
  %v1268 = vunpack.c.l.b16 %v1191
  %v1269 = vunpack.c.l.b16 %v1192
  %v1270 = vunpack.c.l.b16 %v1193
  %v1271 = vunpack.c.l.b16 %v1194
  %v1272 = vunpack.c.l.b16 %v1195
  %v1273 = vunpack.c.l.b16 %v1196
  %v1274 = vunpack.c.l.b16 %v1197
  %v1275 = vunpack.c.l.b16 %v1198
  %v1276 = vunpack.c.l.b16 %v1199
  %v1277 = vunpack.c.l.b16 %v1200
  %v1278 = vunpack.c.l.b16 %v1201
  %v1279 = vunpack.c.l.b16 %v1202
  %v1280 = vunpack.c.l.b16 %v1203
  %v1281 = vunpack.c.l.b16 %v1204
  %v1282 = vunpack.c.l.b16 %v1205
  %v1283 = vunpack.c.l.b16 %v1206
  %v1284 = vunpack.c.l.b16 %v1207
  %v1285 = vunpack.c.l.b16 %v1208
  %v1286 = vunpack.c.l.b16 %v1209
  %v1287 = vunpack.c.l.b16 %v1210
  %v1288 = vunpack.c.l.b16 %v1211
  %v1289 = vunpack.c.l.b16 %v1212
  %v1290 = vunpack.c.l.b16 %v1213
  %v1291 = vunpack.c.l.b16 %v1214
  %v1292 = vunpack.c.l.b16 %v1215
  %v1293 = vunpack.c.l.b16 %v1216
  %v1294 = vunpack.c.l.b16 %v1217
  %v1295 = vunpack.c.l.b16 %v1218
  %v1296 = vunpack.c.l.b16 %v1219
  %v1297 = vunpack.c.l.b16 %v1220
  %v1298 = vunpack.c.l.b16 %v1221
  %v1299 = vunpack.c.l.b16 %v1222
  %v1300 = vunpack.c.l.b16 %v1223
  %v1301 = vunpack.c.l.b16 %v1224
  %v1302 = vpack.c.b16 %v1267, %v1266
  %v1303 = vpack.c.b16 %v1269, %v1268
  %v1304 = vpack.c.b16 %v1271, %v1270
  %v1305 = vpack.c.b16 %v1273, %v1272
  %v1306 = vpack.c.b16 %v1275, %v1274
  %v1307 = vpack.c.b16 %v1277, %v1276
  %v1308 = vpack.c.b16 %v1279, %v1278
  %v1309 = vpack.c.b16 %v1281, %v1280
  %v1310 = vpack.c.b16 %v1283, %v1282
  %v1311 = vpack.c.b16 %v1285, %v1284
  %v1312 = vpack.c.b16 %v1287, %v1286
  %v1313 = vpack.c.b16 %v1289, %v1288
  %v1314 = vpack.c.b16 %v1291, %v1290
  %v1315 = vpack.c.b16 %v1293, %v1292
  %v1316 = vpack.c.b16 %v1295, %v1294
  %v1317 = vpack.c.b16 %v1297, %v1296
  %v1318 = vpack.c.b16 %v1299, %v1298
  %v1319 = vpack.c.b16 %v1301, %v1300
  %v1339 = vsel %vm441, %v1119, 0
  %v1342 = vsel %vm441, %v1120, 0
  %1344 = vmatprep.subr.bf16.mxu0 0
  %1345 = vmatpush1.bf16.msra.mxu0 %v1302
  %1346 = vmatprep.subr.bf16.mxu0 0
  %1347 = vmatpush1.bf16.msra.mxu0 %v1303
  %1348 = vmatprep.subr.bf16.mxu0 0
  %1349 = vmatpush1.bf16.msra.mxu0 %v1304
  %1350 = vmatprep.subr.bf16.mxu0 0
  %1351 = vmatpush1.bf16.msra.mxu0 %v1305
  %1352 = vmatprep.subr.bf16.mxu0 0
  %1353 = vmatpush1.bf16.msra.mxu0 %v1306
  %1354 = vmatprep.subr.bf16.mxu0 0
  %1355 = vmatpush1.bf16.msra.mxu0 %v1307
  %1356 = vmatprep.subr.bf16.mxu0 0
  %1357 = vmatpush1.bf16.msra.mxu0 %v1308
  %1358 = vmatprep.subr.bf16.mxu0 0
  %1359 = vmatpush1.bf16.msra.mxu0 %v1309
  %1360 = vmatprep.subr.bf16.mxu0 0
  %1361 = vmatpush1.bf16.msra.mxu0 %v1310
  %1362 = vmatprep.subr.bf16.mxu0 0
  %1363 = vmatpush1.bf16.msra.mxu0 %v1311
  %1364 = vmatprep.subr.bf16.mxu0 0
  %1365 = vmatpush1.bf16.msra.mxu0 %v1312
  %1366 = vmatprep.subr.bf16.mxu0 0
  %1367 = vmatpush1.bf16.msra.mxu0 %v1313
  %1368 = vmatprep.subr.bf16.mxu0 0
  %1369 = vmatpush1.bf16.msra.mxu0 %v1314
  %1370 = vmatprep.subr.bf16.mxu0 0
  %1371 = vmatpush1.bf16.msra.mxu0 %v1315
  %1372 = vmatprep.subr.bf16.mxu0 0
  %1373 = vmatpush1.bf16.msra.mxu0 %v1316
  %1374 = vmatprep.subr.bf16.mxu0 0
  %1375 = vmatpush1.bf16.msra.mxu0 %v1317
  %1376 = vmatprep.mubr.bf16.mxu0 %v1184
  %1377 = vmatmul.mubr.bf16.gmra.mrb[0].mxu0 %v1168
  %v1378 = vpop.f32.mrb[0].mxu0
  %v1379 = vadd.f32 %v1229, %v1378
  %v1380 = vpop.f32.mrb[0].mxu0
  %v1381 = vpop.f32.mrb[0].mxu0
  %v1382 = vadd.f32 %v1229, %v1381
  %v1383 = vpop.f32.mrb[0].mxu0
  %1384 = vmatprep.mubr.bf16.mxu0 %v1187
  %1385 = vmatmul.mubr.bf16.gmra.mrb[0].mxu0 %v1171
  %v1386 = vpop.f32.mrb[0].mxu0
  %v1387 = vadd.f32 %v1229, %v1386
  %v1388 = vpop.f32.mrb[0].mxu0
  %v1389 = vpop.f32.mrb[0].mxu0
  %v1390 = vadd.f32 %v1229, %v1389
  %v1391 = vpop.f32.mrb[0].mxu0
  %1392 = vdwg.mxu0
  %1393 = vmatprep.subr.bf16.mxu0 0
  %1394 = vmatpush1.bf16.msra.mxu0 %v1318
  %1395 = vmatprep.subr.bf16.mxu0 0
  %1396 = vmatpush1.bf16.msra.mxu0 %v1319
  %1397 = vmatprep.subr.bf16.mxu0 0
  %1398 = vmatpush1.bf16.msra.mxu0 0
  %1399 = vmatprep.subr.bf16.mxu0 0
  %1400 = vmatpush1.bf16.msra.mxu0 0
  %1401 = vmatprep.subr.bf16.mxu0 0
  %1402 = vmatpush1.bf16.msra.mxu0 0
  %1403 = vmatprep.subr.bf16.mxu0 0
  %1404 = vmatpush1.bf16.msra.mxu0 0
  %1405 = vmatprep.subr.bf16.mxu0 0
  %1406 = vmatpush1.bf16.msra.mxu0 0
  %1407 = vmatprep.subr.bf16.mxu0 0
  %1408 = vmatpush1.bf16.msra.mxu0 0
  %1409 = vmatprep.subr.bf16.mxu0 0
  %1410 = vmatpush1.bf16.msra.mxu0 0
  %1411 = vmatprep.subr.bf16.mxu0 0
  %1412 = vmatpush1.bf16.msra.mxu0 0
  %1413 = vmatprep.subr.bf16.mxu0 0
  %1414 = vmatpush1.bf16.msra.mxu0 0
  %1415 = vmatprep.subr.bf16.mxu0 0
  %1416 = vmatpush1.bf16.msra.mxu0 0
  %1417 = vmatprep.subr.bf16.mxu0 0
  %1418 = vmatpush1.bf16.msra.mxu0 0
  %1419 = vmatprep.subr.bf16.mxu0 0
  %1420 = vmatpush1.bf16.msra.mxu0 0
  %1421 = vmatprep.subr.bf16.mxu0 0
  %1422 = vmatpush1.bf16.msra.mxu0 0
  %1423 = vmatprep.subr.bf16.mxu0 0
  %1424 = vmatpush1.bf16.msra.mxu0 0
  %1425 = vmatprep.mubr.bf16.mxu0 0
  %1426 = vmatmul.mubr.bf16.gmra.mrb[0].mxu0 %v1339
  %v1427 = vpop.f32.mrb[0].mxu0
  %v1428 = vadd.f32 %v1379, %v1427
  %v1429 = vpop.f32.mrb[0].mxu0
  %v1430 = vpop.f32.mrb[0].mxu0
  %v1431 = vadd.f32 %v1382, %v1430
  %v1432 = vpop.f32.mrb[0].mxu0
  %1433 = vmatprep.mubr.bf16.mxu0 0
  %1434 = vmatmul.mubr.bf16.gmra.mrb[0].mxu0 %v1342
  %v1435 = vpop.f32.mrb[0].mxu0
  %v1436 = vadd.f32 %v1387, %v1435
  %v1437 = vpop.f32.mrb[0].mxu0
  %v1438 = vpop.f32.mrb[0].mxu0
  %v1439 = vadd.f32 %v1390, %v1438
  %v1440 = vpop.f32.mrb[0].mxu0
  %1441 = vdwg.mxu0
  %v1442 = vmax.f32 %v1428, 0.0
  %v1443 = vmax.f32 %v1431, 0.0
  %v1444 = vmax.f32 %v1436, 0.0
  %v1445 = vmax.f32 %v1439, 0.0
  %v1446 = vadd.f32 %v1442, %v23
  %v1447 = vadd.f32 %v1443, %v24
  %v1448 = vadd.f32 %v1444, %v25
  %v1449 = vadd.f32 %v1445, %v26
  %v1450 = vld [vmem:[%s1 + $0x198] sm:$0xf]
  %v1451 = vld [vmem:[%s1 + $0x19c] sm:$0xf]
  %v1452 = vld [vmem:[%s1 + $0x1a0] sm:$0xf]
  %v1453 = vld [vmem:[%s1 + $0x1a4] sm:$0xf]
  %v1454 = vld [vmem:[%s1 + $0x1a8] sm:$0xf]
  %v1455 = vld [vmem:[%s1 + $0x1ac] sm:$0xf]
  %v1456 = vld [vmem:[%s1 + $0x1b0] sm:$0xf]
  %v1457 = vld [vmem:[%s1 + $0x1b4] sm:$0xf]
  %v1458 = vpack.c.bf16 %v1447, %v1446
  %v1459 = vpack.c.bf16 %v1449, %v1448
  %v1460 = vld [vmem:[%s2 + $0x4] sm:$0x1]
  %v1461 = vlaneseq
  %v1462 = vshrl.u32 %v1461, 7
  %v1463 = vsub.s32 0, %v1462
  %v1464 = vrot.slane %v1460, %v1463
  %v1473 = vunpack.c.l.b16 %v1450
  %v1474 = vunpack.c.l.b16 %v1451
  %v1475 = vunpack.c.l.b16 %v1452
  %v1476 = vunpack.c.l.b16 %v1453
  %v1477 = vunpack.c.l.b16 %v1454
  %v1478 = vunpack.c.l.b16 %v1455
  %v1479 = vunpack.c.l.b16 %v1456
  %v1480 = vunpack.c.l.b16 %v1457
  %v1481 = vpack.c.b16 %v1474, %v1473
  %v1482 = vpack.c.b16 %v1476, %v1475
  %v1483 = vpack.c.b16 %v1478, %v1477
  %v1484 = vpack.c.b16 %v1480, %v1479
  %v1490 = vsel %vm160, %v1458, 0
  %v1493 = vsel %vm160, %v1459, 0
  %1495 = vmatprep.subr.bf16.mxu0 0
  %1496 = vmatpush1.bf16.msra.mxu0 %v1481
  %1497 = vmatprep.subr.bf16.mxu0 0
  %1498 = vmatpush1.bf16.msra.mxu0 %v1482
  %1499 = vmatprep.subr.bf16.mxu0 0
  %1500 = vmatpush1.bf16.msra.mxu0 %v1483
  %1501 = vmatprep.subr.bf16.mxu0 0
  %1502 = vmatpush1.bf16.msra.mxu0 %v1484
  %1503 = vmatprep.subr.bf16.mxu0 0
  %1504 = vmatpush1.bf16.msra.mxu0 0
  %1505 = vmatprep.subr.bf16.mxu0 0
  %1506 = vmatpush1.bf16.msra.mxu0 0
  %1507 = vmatprep.subr.bf16.mxu0 0
  %1508 = vmatpush1.bf16.msra.mxu0 0
  %1509 = vmatprep.subr.bf16.mxu0 0
  %1510 = vmatpush1.bf16.msra.mxu0 0
  %1511 = vmatprep.subr.bf16.mxu0 0
  %1512 = vmatpush1.bf16.msra.mxu0 0
  %1513 = vmatprep.subr.bf16.mxu0 0
  %1514 = vmatpush1.bf16.msra.mxu0 0
  %1515 = vmatprep.subr.bf16.mxu0 0
  %1516 = vmatpush1.bf16.msra.mxu0 0
  %1517 = vmatprep.subr.bf16.mxu0 0
  %1518 = vmatpush1.bf16.msra.mxu0 0
  %1519 = vmatprep.subr.bf16.mxu0 0
  %1520 = vmatpush1.bf16.msra.mxu0 0
  %1521 = vmatprep.subr.bf16.mxu0 0
  %1522 = vmatpush1.bf16.msra.mxu0 0
  %1523 = vmatprep.subr.bf16.mxu0 0
  %1524 = vmatpush1.bf16.msra.mxu0 0
  %1525 = vmatprep.subr.bf16.mxu0 0
  %1526 = vmatpush1.bf16.msra.mxu0 0
  %1527 = vmatprep.mubr.bf16.mxu0 0
  %1528 = vmatmul.mubr.bf16.gmra.mrb[0].mxu0 %v1490
  %v1529 = vpop.f32.mrb[0].mxu0
  %v1530 = vadd.f32 %v1464, %v1529
  %v1531 = vpop.f32.mrb[0].mxu0
  %v1532 = vpop.f32.mrb[0].mxu0
  %v1533 = vadd.f32 %v1464, %v1532
  %v1534 = vpop.f32.mrb[0].mxu0
  %1535 = vmatprep.mubr.bf16.mxu0 0
  %1536 = vmatmul.mubr.bf16.gmra.mrb[0].mxu0 %v1493
  %v1537 = vpop.f32.mrb[0].mxu0
  %v1538 = vadd.f32 %v1464, %v1537
  %v1539 = vpop.f32.mrb[0].mxu0
  %v1540 = vpop.f32.mrb[0].mxu0
  %v1541 = vadd.f32 %v1464, %v1540
  %v1542 = vpop.f32.mrb[0].mxu0
  %1543 = vdwg.mxu0
  %1544 = vst [vmem:[%s3] sm:$0xff] %v1530
  %1545 = vst [vmem:[%s3 + $0x8] sm:$0xff] %v1533
  %1546 = vst [vmem:[%s3 + $0x10] sm:$0xff] %v1538
  %1547 = vst [vmem:[%s3 + $0x18] sm:$0xff] %v1541
  // Predicated region
  $region14: #{segmentator_forward.1} parent=0 // pred_check
    _
  $region15: #{segmentator_forward.1} parent=0 // pred_check_branch
    %1549 = sbr.rel (0) target = $region17
  $region16: #{segmentator_forward.1} parent=0 // pred_region
    _
  $region17: #{segmentator_forward.1} parent=0 // pred_fallthru
    _
  // Predicated region
  $region18: #{segmentator_forward.1} parent=0 // pred_check
    _
  $region19: #{segmentator_forward.1} parent=0 // pred_check_branch
    %1551 = sbr.rel (0) target = $region21
  $region20: #{segmentator_forward.1} parent=0 // pred_region
    _
  $region21: #{segmentator_forward.1} parent=0 // pred_fallthru
    _

</llo_original>
